<compile_context>
chip_gen: v5e
topology: v5e:2x2
jax: 0.10.0
libtpu: 0.0.40
codegen_flags: <defaults>
</compile_context>

<pallas_src>
import functools

import jax
import jax.numpy as jnp
from jax.experimental import pallas as pl
from jax.experimental.pallas import tpu as pltpu


# ---------------------------------------------------------------------------
# Fused kernel: embedding + all encoder layers + shared LayerNorm residual
# + masked max.  One grid step = one batch element ("parallel" -> megacore).
# ---------------------------------------------------------------------------
def self_attention_kernel(ids_ref, mcol_ref, mrow_ref, emb_ref, wq_ref, bq_ref,
                          wk_ref, bk_ref, a2_ref, b2_ref, o_ref, *,
                          num_layers, head):
    f32 = jnp.float32
    bf16 = jnp.bfloat16

    ids = ids_ref[0]                       # (S, 1) int32 token ids
    S = ids.shape[0]
    vocab, D = emb_ref.shape
    A = wq_ref.shape[-1]                   # attention_dim (=32 in SAM)
    H = head
    Ah = A // H                            # per-head q/k dim  (k.size(-1))
    Dh = D // H                            # per-head v dim
    scale = float(Ah) ** -0.25             # torch: scores / k.size(-1)**0.25

    # --- embedding lookup fused in-kernel: one-hot (S,V) @ emb (V,D) on the MXU
    iota_v = jax.lax.broadcasted_iota(jnp.int32, (S, vocab), 1)
    one_hot = (ids == iota_v).astype(f32)                       # (S, vocab)
    x = jnp.dot(one_hot, emb_ref[...], preferred_element_type=f32)   # (S, D)

    # Pairwise mask built in-kernel (no O(B*S^2) HBM traffic).
    mcol = mcol_ref[0]                     # (S, 1) f32
    mrow = mrow_ref[0]                     # (1, S) f32
    pair = (mcol * mrow) > 0.0             # (S, S) bool, symmetric

    a2 = a2_ref[...]                       # (1, D) shared LayerNorm scale
    b2 = b2_ref[...]                       # (1, D) shared LayerNorm shift

    def layer(l, x):
        # --- SAM: q/k = ReLU(Linear(x)), v = x --------------------------------
        q = jnp.maximum(
            jnp.dot(x, wq_ref[l], preferred_element_type=f32) + bq_ref[l], 0.0)
        k = jnp.maximum(
            jnp.dot(x, wk_ref[l], preferred_element_type=f32) + bk_ref[l], 0.0)
        q = q * scale                      # fold score scale into the (S,A) operand

        # heads on a leading batch axis (no per-head loop / concat)
        qh = jnp.swapaxes(q.reshape(S, H, Ah), 0, 1).astype(bf16)   # (H, S, Ah)
        kh = jnp.swapaxes(k.reshape(S, H, Ah), 0, 1).astype(bf16)   # (H, S, Ah)
        vh = jnp.swapaxes(x.reshape(S, H, Dh), 0, 1).astype(bf16)   # (H, S, Dh)

        # Scores stored key-major: s[h,k,q] == torch scores[b,h,q,k].
        s = jnp.einsum("hka,hqa->hkq", kh, qh, preferred_element_type=f32)
        s = jnp.where(pair[None], s, -10000000.0)   # masked_fill_(~mask, -1e7)

        # torch F.softmax(scores, dim=2) is over the *query* axis == last axis here.
        s = s - jnp.max(s, axis=-1, keepdims=True)
        e = jnp.exp(s)
        p = e * pl.reciprocal(jnp.sum(e, axis=-1, keepdims=True), approx=True)

        # torch: scores.transpose(2,3) @ v  -> contraction over q on the MXU,
        # no explicit (S,S) transpose materialized.
        ctx = jnp.einsum("hkq,hqd->hkd", p.astype(bf16), vh,
                         preferred_element_type=f32)                # (H, S, Dh)
        att = jnp.swapaxes(ctx, 0, 1).reshape(S, D)                 # merge heads

        # --- shared LayerNorm (torch: unbiased std, eps added to std) + residual
        mean = jnp.mean(att, axis=-1, keepdims=True)
        var = jnp.sum((att - mean) ** 2, axis=-1, keepdims=True) / (D - 1)
        inv = pl.reciprocal(jnp.sqrt(var) + 1e-6, approx=True)
        return x + a2 * (att - mean) * inv + b2

    x = jax.lax.fori_loop(0, num_layers, layer, x, unroll=True)

    # torch: x.masked_fill_(~mask, -inf).max(dim=1)[0]
    valid = mcol > 0.0                               # (S, 1) bool
    o_ref[0] = jnp.max(jnp.where(valid, x, -jnp.inf), axis=0, keepdims=True)


# ---------------------------------------------------------------------------
# Wrapper: only tiny mask/ids reshapes in JAX, everything else in Pallas.
# ---------------------------------------------------------------------------
def self_attention_forward(ids, mask_bool, params):
    B, S = ids.shape
    vocab, D = params["emb"].shape
    L, _, A = params["wq"].shape
    head = params["head"]

    ids3 = ids.astype(jnp.int32)[:, :, None]         # (B, S, 1) int32
    mask_col = mask_bool.astype(jnp.float32)          # (B, S, 1)
    mask_row = jnp.swapaxes(mask_col, 1, 2)           # (B, 1, S)

    kernel = functools.partial(self_attention_kernel, num_layers=L, head=head)
    out = pl.pallas_call(
        kernel,
        out_shape=jax.ShapeDtypeStruct((B, 1, D), jnp.float32),
        grid_spec=pltpu.PrefetchScalarGridSpec(
            num_scalar_prefetch=0,
            grid=(B,),
            in_specs=[
                pl.BlockSpec((1, S, 1), lambda b: (b, 0, 0)),   # token ids
                pl.BlockSpec((1, S, 1), lambda b: (b, 0, 0)),   # token mask (column)
                pl.BlockSpec((1, 1, S), lambda b: (b, 0, 0)),   # token mask (row)
                pl.BlockSpec((vocab, D), lambda b: (0, 0)),     # embedding table (resident)
                pl.BlockSpec((L, D, A), lambda b: (0, 0, 0)),   # stacked Wq (resident)
                pl.BlockSpec((L, 1, A), lambda b: (0, 0, 0)),   # stacked bq
                pl.BlockSpec((L, D, A), lambda b: (0, 0, 0)),   # stacked Wk
                pl.BlockSpec((L, 1, A), lambda b: (0, 0, 0)),   # stacked bk
                pl.BlockSpec((1, D), lambda b: (0, 0)),         # shared LayerNorm a_2
                pl.BlockSpec((1, D), lambda b: (0, 0)),         # shared LayerNorm b_2
            ],
            out_specs=pl.BlockSpec((1, 1, D), lambda b: (b, 0, 0)),
        ),
        compiler_params=pltpu.CompilerParams(
            dimension_semantics=("parallel",),
            vmem_limit_bytes=32 * 1024 * 1024,
        ),
    )(ids3, mask_col, mask_row, params["emb"], params["wq"], params["bq"],
      params["wk"], params["bk"], params["a2"], params["b2"])
    return out[:, 0, :]                              # (B, D); torch also returns None


if __name__ == "__main__":
    B, S, D = 2, 8, 32          # batch, seq, emb_dim
    head = 4                    # att_head_num  -> Dh = 8
    attention_dim = 32          # fixed inside SAM
    vocab = 16                  # vocab_size
    num_layers = 2              # encoder_layer

    key = jax.random.PRNGKey(0)
    k_emb, k_ids, kwq, kbq, kwk, kbk = jax.random.split(key, 6)

    emb = 0.02 * jax.random.normal(k_emb, (vocab, D), dtype=jnp.float32)
    emb = emb.at[0].set(0.0)                        # padding_idx = 0

    ids = jax.random.randint(k_ids, (B, S), 1, vocab)
    ids = ids.at[1, 6:].set(0)                      # pad the tail of sequence 1
    mask = (ids != 0)[:, :, None]                   # (B, S, 1) bool

    lim = 1.0 / (D ** 0.5)                          # nn.Linear default init range
    params = dict(
        emb=emb,
        wq=jax.random.uniform(kwq, (num_layers, D, attention_dim), jnp.float32, -lim, lim),
        bq=jax.random.uniform(kbq, (num_layers, 1, attention_dim), jnp.float32, -lim, lim),
        wk=jax.random.uniform(kwk, (num_layers, D, attention_dim), jnp.float32, -lim, lim),
        bk=jax.random.uniform(kbk, (num_layers, 1, attention_dim), jnp.float32, -lim, lim),
        a2=jnp.ones((1, D), jnp.float32),           # shared LayerNorm a_2 (ones)
        b2=jnp.zeros((1, D), jnp.float32),          # shared LayerNorm b_2 (zeros)
        head=head,
    )

    out = self_attention_forward(ids, mask, params)
    jax.block_until_ready(out)
    assert out.shape == (B, D) and out.dtype == jnp.float32
    assert bool(jnp.all(jnp.isfinite(out)))
    print("KERNEL_OK")
</pallas_src>

<mosaic_0001>
module attributes {stable_mosaic.version = 11 : i64} {
  func.func @self_attention_kernel(%arg0: i32, %arg1: memref<1x8x1xi32, #tpu.memory_space<vmem>>, %arg2: memref<1x8x1xf32, #tpu.memory_space<vmem>>, %arg3: memref<1x1x8xf32, #tpu.memory_space<vmem>>, %arg4: memref<16x32xf32, #tpu.memory_space<vmem>>, %arg5: memref<2x32x32xf32, #tpu.memory_space<vmem>>, %arg6: memref<2x1x32xf32, #tpu.memory_space<vmem>>, %arg7: memref<2x32x32xf32, #tpu.memory_space<vmem>>, %arg8: memref<2x1x32xf32, #tpu.memory_space<vmem>>, %arg9: memref<1x32xf32, #tpu.memory_space<vmem>>, %arg10: memref<1x32xf32, #tpu.memory_space<vmem>>, %arg11: memref<1x1x32xf32, #tpu.memory_space<vmem>>) attributes {dimension_semantics = [#tpu.dimension_semantics<parallel>], iteration_bounds = array<i64: 2>, scalar_prefetch = 0 : i64, scratch_operands = 0 : i64, tpu.core_type = #tpu.core_type<tc>, window_params = [{transform_indices = @transform_0, window_bounds = array<i64: 1, 8, 1>}, {transform_indices = @transform_1, window_bounds = array<i64: 1, 8, 1>}, {transform_indices = @transform_2, window_bounds = array<i64: 1, 1, 8>}, {pipeline_mode = #tpu.pipeline_mode<synchronous>, transform_indices = @transform_3, window_bounds = array<i64: 16, 32>}, {pipeline_mode = #tpu.pipeline_mode<synchronous>, transform_indices = @transform_4, window_bounds = array<i64: 2, 32, 32>}, {pipeline_mode = #tpu.pipeline_mode<synchronous>, transform_indices = @transform_5, window_bounds = array<i64: 2, 1, 32>}, {pipeline_mode = #tpu.pipeline_mode<synchronous>, transform_indices = @transform_6, window_bounds = array<i64: 2, 32, 32>}, {pipeline_mode = #tpu.pipeline_mode<synchronous>, transform_indices = @transform_7, window_bounds = array<i64: 2, 1, 32>}, {pipeline_mode = #tpu.pipeline_mode<synchronous>, transform_indices = @transform_8, window_bounds = array<i64: 1, 32>}, {pipeline_mode = #tpu.pipeline_mode<synchronous>, transform_indices = @transform_9, window_bounds = array<i64: 1, 32>}, {transform_indices = @transform_10, window_bounds = array<i64: 1, 1, 32>}]} {
    %c0 = arith.constant 0 : index
    %c0_0 = arith.constant 0 : index
    %c0_1 = arith.constant 0 : index
    %0 = vector.load %arg1[%c0, %c0_0, %c0_1] : memref<1x8x1xi32, #tpu.memory_space<vmem>>, vector<1x8x1xi32>
    %1 = vector.shape_cast %0 : vector<1x8x1xi32> to vector<8x1xi32>
    %2 = tpu.iota {dimensions = array<i32: 1>} : vector<8x16xi32>
    %3 = vector.broadcast %1 : vector<8x1xi32> to vector<8x16xi32>
    %4 = arith.cmpi eq, %3, %2 : vector<8x16xi32>
    %5 = arith.extui %4 : vector<8x16xi1> to vector<8x16xi32>
    %6 = arith.sitofp %5 : vector<8x16xi32> to vector<8x16xf32>
    %c0_2 = arith.constant 0 : index
    %c0_3 = arith.constant 0 : index
    %7 = vector.load %arg4[%c0_2, %c0_3] : memref<16x32xf32, #tpu.memory_space<vmem>>, vector<16x32xf32>
    %cst = arith.constant dense<0.000000e+00> : vector<8x32xf32>
    %8 = tpu.matmul %6, %7, %cst {dimension_numbers = #tpu.dot_dimension_numbers<[1], [0], [0], [1], [0, 0, 1, 1], [], []>} : vector<8x16xf32>, vector<16x32xf32>, vector<8x32xf32> -> vector<8x32xf32>
    %c0_4 = arith.constant 0 : index
    %c0_5 = arith.constant 0 : index
    %c0_6 = arith.constant 0 : index
    %9 = vector.load %arg2[%c0_4, %c0_5, %c0_6] : memref<1x8x1xf32, #tpu.memory_space<vmem>>, vector<1x8x1xf32>
    %10 = vector.shape_cast %9 : vector<1x8x1xf32> to vector<8x1xf32>
    %c0_7 = arith.constant 0 : index
    %c0_8 = arith.constant 0 : index
    %c0_9 = arith.constant 0 : index
    %11 = vector.load %arg3[%c0_7, %c0_8, %c0_9] : memref<1x1x8xf32, #tpu.memory_space<vmem>>, vector<1x1x8xf32>
    %12 = vector.shape_cast %11 : vector<1x1x8xf32> to vector<1x8xf32>
    %13 = vector.broadcast %10 : vector<8x1xf32> to vector<8x8xf32>
    %14 = vector.broadcast %12 : vector<1x8xf32> to vector<8x8xf32>
    %15 = arith.mulf %13, %14 : vector<8x8xf32>
    %cst_10 = arith.constant 0.000000e+00 : f32
    %16 = vector.broadcast %cst_10 : f32 to vector<8x8xf32>
    %17 = arith.cmpf ogt, %15, %16 : vector<8x8xf32>
    %c0_11 = arith.constant 0 : index
    %c0_12 = arith.constant 0 : index
    %18 = vector.load %arg9[%c0_11, %c0_12] : memref<1x32xf32, #tpu.memory_space<vmem>>, vector<1x32xf32>
    %c0_13 = arith.constant 0 : index
    %c0_14 = arith.constant 0 : index
    %19 = vector.load %arg10[%c0_13, %c0_14] : memref<1x32xf32, #tpu.memory_space<vmem>>, vector<1x32xf32>
    %c0_i32 = arith.constant 0 : i32
    %20 = arith.index_cast %c0_i32 : i32 to index
    %c0_15 = arith.constant 0 : index
    %c0_16 = arith.constant 0 : index
    %21 = vector.load %arg5[%20, %c0_15, %c0_16] : memref<2x32x32xf32, #tpu.memory_space<vmem>>, vector<1x32x32xf32>
    %22 = vector.shape_cast %21 : vector<1x32x32xf32> to vector<32x32xf32>
    %cst_17 = arith.constant dense<0.000000e+00> : vector<8x32xf32>
    %23 = tpu.matmul %8, %22, %cst_17 {dimension_numbers = #tpu.dot_dimension_numbers<[1], [0], [0], [1], [0, 0, 1, 1], [], []>} : vector<8x32xf32>, vector<32x32xf32>, vector<8x32xf32> -> vector<8x32xf32>
    %24 = arith.index_cast %c0_i32 : i32 to index
    %c0_18 = arith.constant 0 : index
    %c0_19 = arith.constant 0 : index
    %25 = vector.load %arg6[%24, %c0_18, %c0_19] : memref<2x1x32xf32, #tpu.memory_space<vmem>>, vector<1x1x32xf32>
    %26 = vector.shape_cast %25 : vector<1x1x32xf32> to vector<1x32xf32>
    %27 = vector.broadcast %26 : vector<1x32xf32> to vector<8x32xf32>
    %28 = arith.addf %23, %27 : vector<8x32xf32>
    %cst_20 = arith.constant 0.000000e+00 : f32
    %29 = vector.broadcast %cst_20 : f32 to vector<8x32xf32>
    %30 = arith.maximumf %28, %29 : vector<8x32xf32>
    %31 = arith.index_cast %c0_i32 : i32 to index
    %c0_21 = arith.constant 0 : index
    %c0_22 = arith.constant 0 : index
    %32 = vector.load %arg7[%31, %c0_21, %c0_22] : memref<2x32x32xf32, #tpu.memory_space<vmem>>, vector<1x32x32xf32>
    %33 = vector.shape_cast %32 : vector<1x32x32xf32> to vector<32x32xf32>
    %cst_23 = arith.constant dense<0.000000e+00> : vector<8x32xf32>
    %34 = tpu.matmul %8, %33, %cst_23 {dimension_numbers = #tpu.dot_dimension_numbers<[1], [0], [0], [1], [0, 0, 1, 1], [], []>} : vector<8x32xf32>, vector<32x32xf32>, vector<8x32xf32> -> vector<8x32xf32>
    %35 = arith.index_cast %c0_i32 : i32 to index
    %c0_24 = arith.constant 0 : index
    %c0_25 = arith.constant 0 : index
    %36 = vector.load %arg8[%35, %c0_24, %c0_25] : memref<2x1x32xf32, #tpu.memory_space<vmem>>, vector<1x1x32xf32>
    %37 = vector.shape_cast %36 : vector<1x1x32xf32> to vector<1x32xf32>
    %38 = vector.broadcast %37 : vector<1x32xf32> to vector<8x32xf32>
    %39 = arith.addf %34, %38 : vector<8x32xf32>
    %cst_26 = arith.constant 0.000000e+00 : f32
    %40 = vector.broadcast %cst_26 : f32 to vector<8x32xf32>
    %41 = arith.maximumf %39, %40 : vector<8x32xf32>
    %cst_27 = arith.constant 0.594603539 : f32
    %42 = vector.broadcast %cst_27 : f32 to vector<8x32xf32>
    %43 = arith.mulf %30, %42 : vector<8x32xf32>
    %44 = vector.shape_cast %43 : vector<8x32xf32> to vector<8x4x8xf32>
    %45 = tpu.transpose %44, [1, 0, 2] : vector<8x4x8xf32> -> vector<4x8x8xf32>
    %46 = arith.truncf %45 : vector<4x8x8xf32> to vector<4x8x8xbf16>
    %47 = vector.shape_cast %41 : vector<8x32xf32> to vector<8x4x8xf32>
    %48 = tpu.transpose %47, [1, 0, 2] : vector<8x4x8xf32> -> vector<4x8x8xf32>
    %49 = arith.truncf %48 : vector<4x8x8xf32> to vector<4x8x8xbf16>
    %50 = vector.shape_cast %8 : vector<8x32xf32> to vector<8x4x8xf32>
    %51 = tpu.transpose %50, [1, 0, 2] : vector<8x4x8xf32> -> vector<4x8x8xf32>
    %52 = arith.truncf %51 : vector<4x8x8xf32> to vector<4x8x8xbf16>
    "tpu.trace_start"() <{level = 10 : i32, message = "hka,hqa->hkq"}> : () -> ()
    %cst_28 = arith.constant dense<0.000000e+00> : vector<4x8x8xf32>
    %53 = tpu.matmul %49, %46, %cst_28 {dimension_numbers = #tpu.dot_dimension_numbers<[2], [2], [1], [1], [0, 0, 0, 1, 1, 1], [0], [0]>} : vector<4x8x8xbf16>, vector<4x8x8xbf16>, vector<4x8x8xf32> -> vector<4x8x8xf32>
    "tpu.trace_stop"() : () -> ()
    %54 = vector.shape_cast %17 : vector<8x8xi1> to vector<1x8x8xi1>
    %cst_29 = arith.constant -1.000000e+07 : f32
    %55 = vector.shape_cast %54 : vector<1x8x8xi1> to vector<1x8x8xi1>
    %56 = vector.broadcast %55 : vector<1x8x8xi1> to vector<4x8x8xi1>
    %57 = vector.broadcast %cst_29 : f32 to vector<4x8x8xf32>
    %58 = arith.select %56, %53, %57 : vector<4x8x8xi1>, vector<4x8x8xf32>
    %cst_30 = arith.constant dense<0xFF800000> : vector<4x8xf32>
    %59 = vector.multi_reduction <maximumf>, %58, %cst_30 [2] : vector<4x8x8xf32> to vector<4x8xf32>
    %60 = vector.shape_cast %59 : vector<4x8xf32> to vector<4x8x1xf32>
    %61 = vector.broadcast %60 : vector<4x8x1xf32> to vector<4x8x8xf32>
    %62 = arith.subf %58, %61 : vector<4x8x8xf32>
    %63 = math.exp %62 : vector<4x8x8xf32>
    %cst_31 = arith.constant dense<0.000000e+00> : vector<4x8xf32>
    %64 = vector.multi_reduction <add>, %63, %cst_31 [2] : vector<4x8x8xf32> to vector<4x8xf32>
    %65 = vector.shape_cast %64 : vector<4x8xf32> to vector<4x8x1xf32>
    %66 = tpu.reciprocal %65 {approx = true} : vector<4x8x1xf32> -> vector<4x8x1xf32>
    %67 = vector.broadcast %66 : vector<4x8x1xf32> to vector<4x8x8xf32>
    %68 = arith.mulf %63, %67 : vector<4x8x8xf32>
    %69 = arith.truncf %68 : vector<4x8x8xf32> to vector<4x8x8xbf16>
    "tpu.trace_start"() <{level = 10 : i32, message = "hkq,hqd->hkd"}> : () -> ()
    %cst_32 = arith.constant dense<0.000000e+00> : vector<4x8x8xf32>
    %70 = tpu.matmul %69, %52, %cst_32 {dimension_numbers = #tpu.dot_dimension_numbers<[2], [1], [1], [2], [0, 0, 0, 1, 1, 2], [0], [0]>} : vector<4x8x8xbf16>, vector<4x8x8xbf16>, vector<4x8x8xf32> -> vector<4x8x8xf32>
    "tpu.trace_stop"() : () -> ()
    %71 = tpu.transpose %70, [1, 0, 2] : vector<4x8x8xf32> -> vector<8x4x8xf32>
    %72 = vector.shape_cast %71 : vector<8x4x8xf32> to vector<8x32xf32>
    %cst_33 = arith.constant dense<0.000000e+00> : vector<8xf32>
    %73 = vector.multi_reduction <add>, %72, %cst_33 [1] : vector<8x32xf32> to vector<8xf32>
    %74 = vector.shape_cast %73 : vector<8xf32> to vector<8x1xf32>
    %cst_34 = arith.constant 3.200000e+01 : f32
    %75 = vector.broadcast %cst_34 : f32 to vector<8x1xf32>
    %76 = arith.divf %74, %75 : vector<8x1xf32>
    %77 = vector.broadcast %76 : vector<8x1xf32> to vector<8x32xf32>
    %78 = arith.subf %72, %77 : vector<8x32xf32>
    %79 = arith.mulf %78, %78 : vector<8x32xf32>
    %cst_35 = arith.constant dense<0.000000e+00> : vector<8xf32>
    %80 = vector.multi_reduction <add>, %79, %cst_35 [1] : vector<8x32xf32> to vector<8xf32>
    %81 = vector.shape_cast %80 : vector<8xf32> to vector<8x1xf32>
    %cst_36 = arith.constant 3.100000e+01 : f32
    %82 = vector.broadcast %cst_36 : f32 to vector<8x1xf32>
    %83 = arith.divf %81, %82 : vector<8x1xf32>
    %84 = math.sqrt %83 : vector<8x1xf32>
    %cst_37 = arith.constant 9.99999997E-7 : f32
    %85 = vector.broadcast %cst_37 : f32 to vector<8x1xf32>
    %86 = arith.addf %84, %85 : vector<8x1xf32>
    %87 = tpu.reciprocal %86 {approx = true} : vector<8x1xf32> -> vector<8x1xf32>
    %88 = vector.broadcast %76 : vector<8x1xf32> to vector<8x32xf32>
    %89 = arith.subf %72, %88 : vector<8x32xf32>
    %90 = vector.broadcast %18 : vector<1x32xf32> to vector<8x32xf32>
    %91 = arith.mulf %90, %89 : vector<8x32xf32>
    %92 = vector.broadcast %87 : vector<8x1xf32> to vector<8x32xf32>
    %93 = arith.mulf %91, %92 : vector<8x32xf32>
    %94 = arith.addf %8, %93 : vector<8x32xf32>
    %95 = vector.broadcast %19 : vector<1x32xf32> to vector<8x32xf32>
    %96 = arith.addf %94, %95 : vector<8x32xf32>
    %c1_i32 = arith.constant 1 : i32
    %97 = arith.index_cast %c1_i32 : i32 to index
    %c0_38 = arith.constant 0 : index
    %c0_39 = arith.constant 0 : index
    %98 = vector.load %arg5[%97, %c0_38, %c0_39] : memref<2x32x32xf32, #tpu.memory_space<vmem>>, vector<1x32x32xf32>
    %99 = vector.shape_cast %98 : vector<1x32x32xf32> to vector<32x32xf32>
    %cst_40 = arith.constant dense<0.000000e+00> : vector<8x32xf32>
    %100 = tpu.matmul %96, %99, %cst_40 {dimension_numbers = #tpu.dot_dimension_numbers<[1], [0], [0], [1], [0, 0, 1, 1], [], []>} : vector<8x32xf32>, vector<32x32xf32>, vector<8x32xf32> -> vector<8x32xf32>
    %101 = arith.index_cast %c1_i32 : i32 to index
    %c0_41 = arith.constant 0 : index
    %c0_42 = arith.constant 0 : index
    %102 = vector.load %arg6[%101, %c0_41, %c0_42] : memref<2x1x32xf32, #tpu.memory_space<vmem>>, vector<1x1x32xf32>
    %103 = vector.shape_cast %102 : vector<1x1x32xf32> to vector<1x32xf32>
    %104 = vector.broadcast %103 : vector<1x32xf32> to vector<8x32xf32>
    %105 = arith.addf %100, %104 : vector<8x32xf32>
    %cst_43 = arith.constant 0.000000e+00 : f32
    %106 = vector.broadcast %cst_43 : f32 to vector<8x32xf32>
    %107 = arith.maximumf %105, %106 : vector<8x32xf32>
    %108 = arith.index_cast %c1_i32 : i32 to index
    %c0_44 = arith.constant 0 : index
    %c0_45 = arith.constant 0 : index
    %109 = vector.load %arg7[%108, %c0_44, %c0_45] : memref<2x32x32xf32, #tpu.memory_space<vmem>>, vector<1x32x32xf32>
    %110 = vector.shape_cast %109 : vector<1x32x32xf32> to vector<32x32xf32>
    %cst_46 = arith.constant dense<0.000000e+00> : vector<8x32xf32>
    %111 = tpu.matmul %96, %110, %cst_46 {dimension_numbers = #tpu.dot_dimension_numbers<[1], [0], [0], [1], [0, 0, 1, 1], [], []>} : vector<8x32xf32>, vector<32x32xf32>, vector<8x32xf32> -> vector<8x32xf32>
    %112 = arith.index_cast %c1_i32 : i32 to index
    %c0_47 = arith.constant 0 : index
    %c0_48 = arith.constant 0 : index
    %113 = vector.load %arg8[%112, %c0_47, %c0_48] : memref<2x1x32xf32, #tpu.memory_space<vmem>>, vector<1x1x32xf32>
    %114 = vector.shape_cast %113 : vector<1x1x32xf32> to vector<1x32xf32>
    %115 = vector.broadcast %114 : vector<1x32xf32> to vector<8x32xf32>
    %116 = arith.addf %111, %115 : vector<8x32xf32>
    %cst_49 = arith.constant 0.000000e+00 : f32
    %117 = vector.broadcast %cst_49 : f32 to vector<8x32xf32>
    %118 = arith.maximumf %116, %117 : vector<8x32xf32>
    %cst_50 = arith.constant 0.594603539 : f32
    %119 = vector.broadcast %cst_50 : f32 to vector<8x32xf32>
    %120 = arith.mulf %107, %119 : vector<8x32xf32>
    %121 = vector.shape_cast %120 : vector<8x32xf32> to vector<8x4x8xf32>
    %122 = tpu.transpose %121, [1, 0, 2] : vector<8x4x8xf32> -> vector<4x8x8xf32>
    %123 = arith.truncf %122 : vector<4x8x8xf32> to vector<4x8x8xbf16>
    %124 = vector.shape_cast %118 : vector<8x32xf32> to vector<8x4x8xf32>
    %125 = tpu.transpose %124, [1, 0, 2] : vector<8x4x8xf32> -> vector<4x8x8xf32>
    %126 = arith.truncf %125 : vector<4x8x8xf32> to vector<4x8x8xbf16>
    %127 = vector.shape_cast %96 : vector<8x32xf32> to vector<8x4x8xf32>
    %128 = tpu.transpose %127, [1, 0, 2] : vector<8x4x8xf32> -> vector<4x8x8xf32>
    %129 = arith.truncf %128 : vector<4x8x8xf32> to vector<4x8x8xbf16>
    "tpu.trace_start"() <{level = 10 : i32, message = "hka,hqa->hkq"}> : () -> ()
    %cst_51 = arith.constant dense<0.000000e+00> : vector<4x8x8xf32>
    %130 = tpu.matmul %126, %123, %cst_51 {dimension_numbers = #tpu.dot_dimension_numbers<[2], [2], [1], [1], [0, 0, 0, 1, 1, 1], [0], [0]>} : vector<4x8x8xbf16>, vector<4x8x8xbf16>, vector<4x8x8xf32> -> vector<4x8x8xf32>
    "tpu.trace_stop"() : () -> ()
    %131 = vector.shape_cast %17 : vector<8x8xi1> to vector<1x8x8xi1>
    %cst_52 = arith.constant -1.000000e+07 : f32
    %132 = vector.shape_cast %131 : vector<1x8x8xi1> to vector<1x8x8xi1>
    %133 = vector.broadcast %132 : vector<1x8x8xi1> to vector<4x8x8xi1>
    %134 = vector.broadcast %cst_52 : f32 to vector<4x8x8xf32>
    %135 = arith.select %133, %130, %134 : vector<4x8x8xi1>, vector<4x8x8xf32>
    %cst_53 = arith.constant dense<0xFF800000> : vector<4x8xf32>
    %136 = vector.multi_reduction <maximumf>, %135, %cst_53 [2] : vector<4x8x8xf32> to vector<4x8xf32>
    %137 = vector.shape_cast %136 : vector<4x8xf32> to vector<4x8x1xf32>
    %138 = vector.broadcast %137 : vector<4x8x1xf32> to vector<4x8x8xf32>
    %139 = arith.subf %135, %138 : vector<4x8x8xf32>
    %140 = math.exp %139 : vector<4x8x8xf32>
    %cst_54 = arith.constant dense<0.000000e+00> : vector<4x8xf32>
    %141 = vector.multi_reduction <add>, %140, %cst_54 [2] : vector<4x8x8xf32> to vector<4x8xf32>
    %142 = vector.shape_cast %141 : vector<4x8xf32> to vector<4x8x1xf32>
    %143 = tpu.reciprocal %142 {approx = true} : vector<4x8x1xf32> -> vector<4x8x1xf32>
    %144 = vector.broadcast %143 : vector<4x8x1xf32> to vector<4x8x8xf32>
    %145 = arith.mulf %140, %144 : vector<4x8x8xf32>
    %146 = arith.truncf %145 : vector<4x8x8xf32> to vector<4x8x8xbf16>
    "tpu.trace_start"() <{level = 10 : i32, message = "hkq,hqd->hkd"}> : () -> ()
    %cst_55 = arith.constant dense<0.000000e+00> : vector<4x8x8xf32>
    %147 = tpu.matmul %146, %129, %cst_55 {dimension_numbers = #tpu.dot_dimension_numbers<[2], [1], [1], [2], [0, 0, 0, 1, 1, 2], [0], [0]>} : vector<4x8x8xbf16>, vector<4x8x8xbf16>, vector<4x8x8xf32> -> vector<4x8x8xf32>
    "tpu.trace_stop"() : () -> ()
    %148 = tpu.transpose %147, [1, 0, 2] : vector<4x8x8xf32> -> vector<8x4x8xf32>
    %149 = vector.shape_cast %148 : vector<8x4x8xf32> to vector<8x32xf32>
    %cst_56 = arith.constant dense<0.000000e+00> : vector<8xf32>
    %150 = vector.multi_reduction <add>, %149, %cst_56 [1] : vector<8x32xf32> to vector<8xf32>
    %151 = vector.shape_cast %150 : vector<8xf32> to vector<8x1xf32>
    %cst_57 = arith.constant 3.200000e+01 : f32
    %152 = vector.broadcast %cst_57 : f32 to vector<8x1xf32>
    %153 = arith.divf %151, %152 : vector<8x1xf32>
    %154 = vector.broadcast %153 : vector<8x1xf32> to vector<8x32xf32>
    %155 = arith.subf %149, %154 : vector<8x32xf32>
    %156 = arith.mulf %155, %155 : vector<8x32xf32>
    %cst_58 = arith.constant dense<0.000000e+00> : vector<8xf32>
    %157 = vector.multi_reduction <add>, %156, %cst_58 [1] : vector<8x32xf32> to vector<8xf32>
    %158 = vector.shape_cast %157 : vector<8xf32> to vector<8x1xf32>
    %cst_59 = arith.constant 3.100000e+01 : f32
    %159 = vector.broadcast %cst_59 : f32 to vector<8x1xf32>
    %160 = arith.divf %158, %159 : vector<8x1xf32>
    %161 = math.sqrt %160 : vector<8x1xf32>
    %cst_60 = arith.constant 9.99999997E-7 : f32
    %162 = vector.broadcast %cst_60 : f32 to vector<8x1xf32>
    %163 = arith.addf %161, %162 : vector<8x1xf32>
    %164 = tpu.reciprocal %163 {approx = true} : vector<8x1xf32> -> vector<8x1xf32>
    %165 = vector.broadcast %153 : vector<8x1xf32> to vector<8x32xf32>
    %166 = arith.subf %149, %165 : vector<8x32xf32>
    %167 = vector.broadcast %18 : vector<1x32xf32> to vector<8x32xf32>
    %168 = arith.mulf %167, %166 : vector<8x32xf32>
    %169 = vector.broadcast %164 : vector<8x1xf32> to vector<8x32xf32>
    %170 = arith.mulf %168, %169 : vector<8x32xf32>
    %171 = arith.addf %96, %170 : vector<8x32xf32>
    %172 = vector.broadcast %19 : vector<1x32xf32> to vector<8x32xf32>
    %173 = arith.addf %171, %172 : vector<8x32xf32>
    %c2_i32 = arith.constant 2 : i32
    %cst_61 = arith.constant 0.000000e+00 : f32
    %174 = vector.broadcast %cst_61 : f32 to vector<8x1xf32>
    %175 = arith.cmpf ogt, %10, %174 : vector<8x1xf32>
    %cst_62 = arith.constant 0xFF800000 : f32
    %176 = vector.shape_cast %175 : vector<8x1xi1> to vector<8x1xi1>
    %177 = vector.broadcast %176 : vector<8x1xi1> to vector<8x32xi1>
    %178 = vector.broadcast %cst_62 : f32 to vector<8x32xf32>
    %179 = arith.select %177, %173, %178 : vector<8x32xi1>, vector<8x32xf32>
    %cst_63 = arith.constant dense<0xFF800000> : vector<32xf32>
    %180 = vector.multi_reduction <maximumf>, %179, %cst_63 [0] : vector<8x32xf32> to vector<32xf32>
    %181 = vector.shape_cast %180 : vector<32xf32> to vector<1x32xf32>
    %c0_64 = arith.constant 0 : index
    %c0_65 = arith.constant 0 : index
    %c0_66 = arith.constant 0 : index
    %182 = vector.load %arg11[%c0_64, %c0_65, %c0_66] : memref<1x1x32xf32, #tpu.memory_space<vmem>>, vector<1x1x32xf32>
    %183 = vector.shape_cast %182 : vector<1x1x32xf32> to vector<1x32xf32>
    %184 = vector.shape_cast %181 : vector<1x32xf32> to vector<1x1x32xf32>
    tpu.vector_store %arg11[%c0_64, %c0_65, %c0_66], %184 {strides = array<i32>} : memref<1x1x32xf32, #tpu.memory_space<vmem>>, vector<1x1x32xf32>,
    return
  }
  func.func @transform_0(%arg0: i32) -> (i32, i32, i32) {
    %c0_i32 = arith.constant 0 : i32
    %c0_i32_0 = arith.constant 0 : i32
    %c0_i32_1 = arith.constant 0 : i32
    return %arg0, %c0_i32, %c0_i32_0 : i32, i32, i32
  }
  func.func @transform_1(%arg0: i32) -> (i32, i32, i32) {
    %c0_i32 = arith.constant 0 : i32
    %c0_i32_0 = arith.constant 0 : i32
    %c0_i32_1 = arith.constant 0 : i32
    return %arg0, %c0_i32, %c0_i32_0 : i32, i32, i32
  }
  func.func @transform_2(%arg0: i32) -> (i32, i32, i32) {
    %c0_i32 = arith.constant 0 : i32
    %c0_i32_0 = arith.constant 0 : i32
    %c0_i32_1 = arith.constant 0 : i32
    return %arg0, %c0_i32, %c0_i32_0 : i32, i32, i32
  }
  func.func @transform_3(%arg0: i32) -> (i32, i32) {
    %c0_i32 = arith.constant 0 : i32
    %c0_i32_0 = arith.constant 0 : i32
    %c0_i32_1 = arith.constant 0 : i32
    return %c0_i32, %c0_i32_0 : i32, i32
  }
  func.func @transform_4(%arg0: i32) -> (i32, i32, i32) {
    %c0_i32 = arith.constant 0 : i32
    %c0_i32_0 = arith.constant 0 : i32
    %c0_i32_1 = arith.constant 0 : i32
    %c0_i32_2 = arith.constant 0 : i32
    return %c0_i32, %c0_i32_0, %c0_i32_1 : i32, i32, i32
  }
  func.func @transform_5(%arg0: i32) -> (i32, i32, i32) {
    %c0_i32 = arith.constant 0 : i32
    %c0_i32_0 = arith.constant 0 : i32
    %c0_i32_1 = arith.constant 0 : i32
    %c0_i32_2 = arith.constant 0 : i32
    return %c0_i32, %c0_i32_0, %c0_i32_1 : i32, i32, i32
  }
  func.func @transform_6(%arg0: i32) -> (i32, i32, i32) {
    %c0_i32 = arith.constant 0 : i32
    %c0_i32_0 = arith.constant 0 : i32
    %c0_i32_1 = arith.constant 0 : i32
    %c0_i32_2 = arith.constant 0 : i32
    return %c0_i32, %c0_i32_0, %c0_i32_1 : i32, i32, i32
  }
  func.func @transform_7(%arg0: i32) -> (i32, i32, i32) {
    %c0_i32 = arith.constant 0 : i32
    %c0_i32_0 = arith.constant 0 : i32
    %c0_i32_1 = arith.constant 0 : i32
    %c0_i32_2 = arith.constant 0 : i32
    return %c0_i32, %c0_i32_0, %c0_i32_1 : i32, i32, i32
  }
  func.func @transform_8(%arg0: i32) -> (i32, i32) {
    %c0_i32 = arith.constant 0 : i32
    %c0_i32_0 = arith.constant 0 : i32
    %c0_i32_1 = arith.constant 0 : i32
    return %c0_i32, %c0_i32_0 : i32, i32
  }
  func.func @transform_9(%arg0: i32) -> (i32, i32) {
    %c0_i32 = arith.constant 0 : i32
    %c0_i32_0 = arith.constant 0 : i32
    %c0_i32_1 = arith.constant 0 : i32
    return %c0_i32, %c0_i32_0 : i32, i32
  }
  func.func @transform_10(%arg0: i32) -> (i32, i32, i32) {
    %c0_i32 = arith.constant 0 : i32
    %c0_i32_0 = arith.constant 0 : i32
    %c0_i32_1 = arith.constant 0 : i32
    return %arg0, %c0_i32, %c0_i32_0 : i32, i32, i32
  }
}

</mosaic_0001>

<llo_original>
// kernel: tpu_custom_call.1
$region0: #{tpu_custom_call.1}
  #allocation0 [shape = 'u32[]', space=smem, size = 0x4, offset = 0x4, fixed_abs, tag = 'smem constant byte address 0x4 - core index']
  #allocation1 [shape = 'u32[72,128]{1,0:T(1,128)}', space=vmem, size = 0x9000, scoped, tag = 'internal scratch']
  %s0 = inlined_call_operand.vmem [shape: s32[2,8,1], index: 0, kind: input, shape index: {}]
  %s1 = inlined_call_operand.vmem [shape: f32[2,8,1], index: 1, kind: input, shape index: {}]
  %s2 = inlined_call_operand.vmem [shape: f32[2,1,8], index: 2, kind: input, shape index: {}]
  %s3 = inlined_call_operand.vmem [shape: f32[16,32], index: 3, kind: input, shape index: {}]
  %s4 = inlined_call_operand.hbm [shape: f32[2,32,32], index: 4, kind: input, shape index: {}]
  %s5 = inlined_call_operand.vmem [shape: f32[2,1,32], index: 5, kind: input, shape index: {}]
  %s6 = inlined_call_operand.hbm [shape: f32[2,32,32], index: 6, kind: input, shape index: {}]
  %s7 = inlined_call_operand.vmem [shape: f32[2,1,32], index: 7, kind: input, shape index: {}]
  %s8 = inlined_call_operand.vmem [shape: f32[1,32], index: 8, kind: input, shape index: {}]
  %s9 = inlined_call_operand.vmem [shape: f32[1,32], index: 9, kind: input, shape index: {}]
  %s10 = inlined_call_operand.hbm [shape: f32[2,1,32], index: 10, kind: output, shape index: {}]
  %s11 = sld [smem:[#allocation0]]
  $region81: #{tpu_custom_call.1} parent=0
    _
  %s13 = ssub.s32 1, %s11
  %s14 = scalar_select 0, %s13, %s11
  $region1: #{tpu_custom_call.1} parent=0
    #allocation2 [shape = 'u8[32768]{0}', space=vmem, size = 0x8000, scoped, tag = 'input window, operand 4, single buffered']
    #allocation3 [shape = 's32[2]{0}', space=sflag, size = 0x8, scoped, tag = 'scoped memory for tpu_custom_call.1']
    #allocation4 [shape = 's32[2]{0}', space=sflag, size = 0x8, scoped, tag = 'scoped memory for tpu_custom_call.1']
    #allocation5 [shape = 'u8[32768]{0}', space=vmem, size = 0x8000, scoped, tag = 'input window, operand 6, single buffered']
    #allocation6 [shape = 's32[1]{0}', space=sflag, size = 0x4, scoped, tag = 'scoped memory for tpu_custom_call.1']
    #allocation7 [shape = 'u8[1024]{0}', space=vmem, size = 0x400, scoped, tag = 'output window, operand 0']
    %15 = vsyncpa [#allocation3], 0
    %16 = vsyncpa [#allocation6], 0
    %17 = vsyncpa [#allocation4], 0
    %s18 = scalar_lea.sflag [#allocation4], 1
    %19 = vsyncpa %s18, 0
    loop: start=0, step=1, limit=4
    $region2: #{tpu_custom_call.1} parent=1 // loop_pre_header
      _
    $region3: #{tpu_custom_call.1} parent=1 // loop_header
      %s21 = sphi 0, %s25
      %p22 = scmp.ge.s32.totalorder %s21, 4
      %s31 = sphi 0, %s33
      %s34 = sphi 0, %s31
      %s35 = sphi 0, %s34
      %s51 = sphi 0, %s35
      %s57 = sphi 0, %s59
      %s60 = sphi 0, %s57
      %s61 = sphi 0, %s60
      %s77 = sphi 0, %s61
      %s83 = sphi 0, %s85
      %s86 = sphi 0, %s83
      %s87 = sphi 0, %s86
      %s103 = sphi 0, %s87
      %s107 = sphi 0, %s107
      %s109 = sphi 0, %s107
      %s110 = sphi 0, %s109
      %s124 = sphi 0, %s110
      %s128 = sphi 0, %s128
      %s130 = sphi 0, %s128
      %s131 = sphi 0, %s130
      %s145 = sphi 0, %s131
      %s149 = sphi 0, %s149
      %s151 = sphi 0, %s149
      %s152 = sphi 0, %s151
      %s166 = sphi 0, %s152
      %s170 = sphi 0, %s170
      %s172 = sphi 0, %s170
      %s173 = sphi 0, %s172
      %s187 = sphi 0, %s173
      %s191 = sphi 0, %s191
      %s193 = sphi 0, %s191
      %s194 = sphi 0, %s193
      %s208 = sphi 0, %s194
      %s212 = sphi 0, %s212
      %s214 = sphi 0, %s212
      %s215 = sphi 0, %s214
      %s229 = sphi 0, %s215
      %s233 = sphi 0, %s233
      %s235 = sphi 0, %s233
      %s236 = sphi 0, %s235
      %s250 = sphi 0, %s236
      %s256 = sphi 0, %s258
      %s259 = sphi 0, %s256
      %s260 = sphi 0, %s259
      %s276 = sphi 0, %s260
    $region4: #{tpu_custom_call.1} parent=1 // loop_header_branch
      %24 = sbr.rel (%p22) target = $region8
    $region5: #{tpu_custom_call.1} parent=1 // loop_body
      %s26 = ssub.s32 %s21, 1
      %s27 = ssub.s32 %s21, 2
      %s28 = sadd.s32 %s21, 1
      %s29 = ssub.s32 %s21, %s28
      %p30 = scmp.eq.s32.totalorder %s29, 0
      %s32 = sadd.s32 %s31, 1
      %s33 = scalar_select %p30, %s31, %s32
      %p36 = pneg %p30
      %p37 = scmp.eq.s32.totalorder %s21, 1
      %p38 = por %p36, %p37
      %p39 = scmp.ne.s32.totalorder %s31, %s34
      %p40 = scmp.eq.s32.totalorder %s21, 0
      %p41 = por %p39, %p40
      %p42 = scmp.ne.s32.totalorder %s31, %s34
      %p43 = scmp.eq.s32.totalorder %s26, 1
      %p44 = por %p42, %p43
      %p45 = scmp.ne.s32.totalorder %s34, %s35
      %p46 = scmp.eq.s32.totalorder %s26, 0
      %p47 = por %p45, %p46
      %p48 = scmp.ne.s32.totalorder %s34, %s35
      %p49 = scmp.eq.s32.totalorder %s27, 1
      %p50 = por %p48, %p49
      %p52 = scmp.ne.s32.totalorder %s35, %s51
      %p53 = scmp.eq.s32.totalorder %s27, 0
      %p54 = por %p52, %p53
      %s55 = ssub.s32 %s21, %s28
      %p56 = scmp.eq.s32.totalorder %s55, 0
      %s58 = sadd.s32 %s57, 1
      %s59 = scalar_select %p56, %s57, %s58
      %p62 = pneg %p56
      %p63 = scmp.eq.s32.totalorder %s21, 1
      %p64 = por %p62, %p63
      %p65 = scmp.ne.s32.totalorder %s57, %s60
      %p66 = scmp.eq.s32.totalorder %s21, 0
      %p67 = por %p65, %p66
      %p68 = scmp.ne.s32.totalorder %s57, %s60
      %p69 = scmp.eq.s32.totalorder %s26, 1
      %p70 = por %p68, %p69
      %p71 = scmp.ne.s32.totalorder %s60, %s61
      %p72 = scmp.eq.s32.totalorder %s26, 0
      %p73 = por %p71, %p72
      %p74 = scmp.ne.s32.totalorder %s60, %s61
      %p75 = scmp.eq.s32.totalorder %s27, 1
      %p76 = por %p74, %p75
      %p78 = scmp.ne.s32.totalorder %s61, %s77
      %p79 = scmp.eq.s32.totalorder %s27, 0
      %p80 = por %p78, %p79
      %s81 = ssub.s32 %s21, %s28
      %p82 = scmp.eq.s32.totalorder %s81, 0
      %s84 = sadd.s32 %s83, 1
      %s85 = scalar_select %p82, %s83, %s84
      %p88 = pneg %p82
      %p89 = scmp.eq.s32.totalorder %s21, 1
      %p90 = por %p88, %p89
      %p91 = scmp.ne.s32.totalorder %s83, %s86
      %p92 = scmp.eq.s32.totalorder %s21, 0
      %p93 = por %p91, %p92
      %p94 = scmp.ne.s32.totalorder %s83, %s86
      %p95 = scmp.eq.s32.totalorder %s26, 1
      %p96 = por %p94, %p95
      %p97 = scmp.ne.s32.totalorder %s86, %s87
      %p98 = scmp.eq.s32.totalorder %s26, 0
      %p99 = por %p97, %p98
      %p100 = scmp.ne.s32.totalorder %s86, %s87
      %p101 = scmp.eq.s32.totalorder %s27, 1
      %p102 = por %p100, %p101
      %p104 = scmp.ne.s32.totalorder %s87, %s103
      %p105 = scmp.eq.s32.totalorder %s27, 0
      %p106 = por %p104, %p105
      %s108 = sadd.s32 %s107, 1
      %p111 = scmp.eq.s32.totalorder %s21, 1
      %p112 = scmp.ne.s32.totalorder %s107, %s109
      %p113 = scmp.eq.s32.totalorder %s21, 0
      %p114 = por %p112, %p113
      %p115 = scmp.ne.s32.totalorder %s107, %s109
      %p116 = scmp.eq.s32.totalorder %s26, 1
      %p117 = por %p115, %p116
      %p118 = scmp.ne.s32.totalorder %s109, %s110
      %p119 = scmp.eq.s32.totalorder %s26, 0
      %p120 = por %p118, %p119
      %p121 = scmp.ne.s32.totalorder %s109, %s110
      %p122 = scmp.eq.s32.totalorder %s27, 1
      %p123 = por %p121, %p122
      %p125 = scmp.ne.s32.totalorder %s110, %s124
      %p126 = scmp.eq.s32.totalorder %s27, 0
      %p127 = por %p125, %p126
      %s129 = sadd.s32 %s128, 1
      %p132 = scmp.eq.s32.totalorder %s21, 1
      %p133 = scmp.ne.s32.totalorder %s128, %s130
      %p134 = scmp.eq.s32.totalorder %s21, 0
      %p135 = por %p133, %p134
      %p136 = scmp.ne.s32.totalorder %s128, %s130
      %p137 = scmp.eq.s32.totalorder %s26, 1
      %p138 = por %p136, %p137
      %p139 = scmp.ne.s32.totalorder %s130, %s131
      %p140 = scmp.eq.s32.totalorder %s26, 0
      %p141 = por %p139, %p140
      %p142 = scmp.ne.s32.totalorder %s130, %s131
      %p143 = scmp.eq.s32.totalorder %s27, 1
      %p144 = por %p142, %p143
      %p146 = scmp.ne.s32.totalorder %s131, %s145
      %p147 = scmp.eq.s32.totalorder %s27, 0
      %p148 = por %p146, %p147
      %s150 = sadd.s32 %s149, 1
      %p153 = scmp.eq.s32.totalorder %s21, 1
      %p154 = scmp.ne.s32.totalorder %s149, %s151
      %p155 = scmp.eq.s32.totalorder %s21, 0
      %p156 = por %p154, %p155
      %p157 = scmp.ne.s32.totalorder %s149, %s151
      %p158 = scmp.eq.s32.totalorder %s26, 1
      %p159 = por %p157, %p158
      %p160 = scmp.ne.s32.totalorder %s151, %s152
      %p161 = scmp.eq.s32.totalorder %s26, 0
      %p162 = por %p160, %p161
      %p163 = scmp.ne.s32.totalorder %s151, %s152
      %p164 = scmp.eq.s32.totalorder %s27, 1
      %p165 = por %p163, %p164
      %p167 = scmp.ne.s32.totalorder %s152, %s166
      %p168 = scmp.eq.s32.totalorder %s27, 0
      %p169 = por %p167, %p168
      %s171 = sadd.s32 %s170, 1
      %p174 = scmp.eq.s32.totalorder %s21, 1
      %p175 = scmp.ne.s32.totalorder %s170, %s172
      %p176 = scmp.eq.s32.totalorder %s21, 0
      %p177 = por %p175, %p176
      %p178 = scmp.ne.s32.totalorder %s170, %s172
      %p179 = scmp.eq.s32.totalorder %s26, 1
      %p180 = por %p178, %p179
      %p181 = scmp.ne.s32.totalorder %s172, %s173
      %p182 = scmp.eq.s32.totalorder %s26, 0
      %p183 = por %p181, %p182
      %p184 = scmp.ne.s32.totalorder %s172, %s173
      %p185 = scmp.eq.s32.totalorder %s27, 1
      %p186 = por %p184, %p185
      %p188 = scmp.ne.s32.totalorder %s173, %s187
      %p189 = scmp.eq.s32.totalorder %s27, 0
      %p190 = por %p188, %p189
      %s192 = sadd.s32 %s191, 1
      %p195 = scmp.eq.s32.totalorder %s21, 1
      %p196 = scmp.ne.s32.totalorder %s191, %s193
      %p197 = scmp.eq.s32.totalorder %s21, 0
      %p198 = por %p196, %p197
      %p199 = scmp.ne.s32.totalorder %s191, %s193
      %p200 = scmp.eq.s32.totalorder %s26, 1
      %p201 = por %p199, %p200
      %p202 = scmp.ne.s32.totalorder %s193, %s194
      %p203 = scmp.eq.s32.totalorder %s26, 0
      %p204 = por %p202, %p203
      %p205 = scmp.ne.s32.totalorder %s193, %s194
      %p206 = scmp.eq.s32.totalorder %s27, 1
      %p207 = por %p205, %p206
      %p209 = scmp.ne.s32.totalorder %s194, %s208
      %p210 = scmp.eq.s32.totalorder %s27, 0
      %p211 = por %p209, %p210
      %s213 = sadd.s32 %s212, 1
      %p216 = scmp.eq.s32.totalorder %s21, 1
      %p217 = scmp.ne.s32.totalorder %s212, %s214
      %p218 = scmp.eq.s32.totalorder %s21, 0
      %p219 = por %p217, %p218
      %p220 = scmp.ne.s32.totalorder %s212, %s214
      %p221 = scmp.eq.s32.totalorder %s26, 1
      %p222 = por %p220, %p221
      %p223 = scmp.ne.s32.totalorder %s214, %s215
      %p224 = scmp.eq.s32.totalorder %s26, 0
      %p225 = por %p223, %p224
      %p226 = scmp.ne.s32.totalorder %s214, %s215
      %p227 = scmp.eq.s32.totalorder %s27, 1
      %p228 = por %p226, %p227
      %p230 = scmp.ne.s32.totalorder %s215, %s229
      %p231 = scmp.eq.s32.totalorder %s27, 0
      %p232 = por %p230, %p231
      %s234 = sadd.s32 %s233, 1
      %p237 = scmp.eq.s32.totalorder %s21, 1
      %p238 = scmp.ne.s32.totalorder %s233, %s235
      %p239 = scmp.eq.s32.totalorder %s21, 0
      %p240 = por %p238, %p239
      %p241 = scmp.ne.s32.totalorder %s233, %s235
      %p242 = scmp.eq.s32.totalorder %s26, 1
      %p243 = por %p241, %p242
      %p244 = scmp.ne.s32.totalorder %s235, %s236
      %p245 = scmp.eq.s32.totalorder %s26, 0
      %p246 = por %p244, %p245
      %p247 = scmp.ne.s32.totalorder %s235, %s236
      %p248 = scmp.eq.s32.totalorder %s27, 1
      %p249 = por %p247, %p248
      %p251 = scmp.ne.s32.totalorder %s236, %s250
      %p252 = scmp.eq.s32.totalorder %s27, 0
      %p253 = por %p251, %p252
      %s254 = ssub.s32 %s21, %s28
      %p255 = scmp.eq.s32.totalorder %s254, 0
      %s257 = sadd.s32 %s256, 1
      %s258 = scalar_select %p255, %s256, %s257
      %p261 = pneg %p255
      %p262 = scmp.eq.s32.totalorder %s21, 1
      %p263 = por %p261, %p262
      %p264 = scmp.ne.s32.totalorder %s256, %s259
      %p265 = scmp.eq.s32.totalorder %s21, 0
      %p266 = por %p264, %p265
      %p267 = scmp.ne.s32.totalorder %s256, %s259
      %p268 = scmp.eq.s32.totalorder %s26, 1
      %p269 = por %p267, %p268
      %p270 = scmp.ne.s32.totalorder %s259, %s260
      %p271 = scmp.eq.s32.totalorder %s26, 0
      %p272 = por %p270, %p271
      %p273 = scmp.ne.s32.totalorder %s259, %s260
      %p274 = scmp.eq.s32.totalorder %s27, 1
      %p275 = por %p273, %p274
      %p277 = scmp.ne.s32.totalorder %s260, %s276
      %p278 = scmp.eq.s32.totalorder %s27, 0
      %p279 = por %p277, %p278
      %p280 = scmp.le.s32.totalorder 1, %s21
      %p281 = scmp.lt.s32.totalorder %s21, 3
      %p282 = pnand %p280, %p281
      %p283 = pneg %p282
      // Predicated region
      $region9: #{tpu_custom_call.1} parent=5 // pred_check
        _
      $region10: #{tpu_custom_call.1} parent=5 // pred_check_branch
        %285 = sbr.rel (%p282) target = $region12
      $region11: #{tpu_custom_call.1} parent=5 // pred_region
        %s286 = ssub.s32 %s21, 1
        // Predicated region
        $region13: #{tpu_custom_call.1} parent=11 // pred_check
          %p287 = pneg %p120
        $region14: #{tpu_custom_call.1} parent=11 // pred_check_branch
          %289 = sbr.rel (%p287) target = $region16
        $region15: #{tpu_custom_call.1} parent=11 // pred_region
          _
        $region16: #{tpu_custom_call.1} parent=11 // pred_fallthru
          _
        // Predicated region
        $region17: #{tpu_custom_call.1} parent=11 // pred_check
          %p290 = pneg %p141
        $region18: #{tpu_custom_call.1} parent=11 // pred_check_branch
          %292 = sbr.rel (%p290) target = $region20
        $region19: #{tpu_custom_call.1} parent=11 // pred_region
          %294 = vsyncadd [#allocation3], 0
          %s295 = sshll.u32 %s4, 4
          %s296 = int_to_ptr.hbm [resolvable:$true] %s295
          %s297 = sshll.u32 [#allocation2], 4
          %s298 = int_to_ptr.vmem [resolvable:$true] %s297
          %303 = dma.hbm_to_vmem [thread:$0]  %s296, 1024, %s298, [#allocation3], 128, 128, 8
        $region20: #{tpu_custom_call.1} parent=11 // pred_fallthru
          _
        // Predicated region
        $region21: #{tpu_custom_call.1} parent=11 // pred_check
          %p304 = pneg %p162
        $region22: #{tpu_custom_call.1} parent=11 // pred_check_branch
          %306 = sbr.rel (%p304) target = $region24
        $region23: #{tpu_custom_call.1} parent=11 // pred_region
          _
        $region24: #{tpu_custom_call.1} parent=11 // pred_fallthru
          _
        // Predicated region
        $region25: #{tpu_custom_call.1} parent=11 // pred_check
          %p307 = pneg %p183
        $region26: #{tpu_custom_call.1} parent=11 // pred_check_branch
          %309 = sbr.rel (%p307) target = $region28
        $region27: #{tpu_custom_call.1} parent=11 // pred_region
          %311 = vsyncadd [#allocation6], 0
          %s312 = sshll.u32 %s6, 4
          %s313 = int_to_ptr.hbm [resolvable:$true] %s312
          %s314 = sshll.u32 [#allocation5], 4
          %s315 = int_to_ptr.vmem [resolvable:$true] %s314
          %320 = dma.hbm_to_vmem [thread:$0]  %s313, 1024, %s315, [#allocation6], 128, 128, 8
        $region28: #{tpu_custom_call.1} parent=11 // pred_fallthru
          _
        // Predicated region
        $region29: #{tpu_custom_call.1} parent=11 // pred_check
          %p321 = pneg %p204
        $region30: #{tpu_custom_call.1} parent=11 // pred_check_branch
          %323 = sbr.rel (%p321) target = $region32
        $region31: #{tpu_custom_call.1} parent=11 // pred_region
          _
        $region32: #{tpu_custom_call.1} parent=11 // pred_fallthru
          _
        // Predicated region
        $region33: #{tpu_custom_call.1} parent=11 // pred_check
          %p324 = pneg %p225
        $region34: #{tpu_custom_call.1} parent=11 // pred_check_branch
          %326 = sbr.rel (%p324) target = $region36
        $region35: #{tpu_custom_call.1} parent=11 // pred_region
          _
        $region36: #{tpu_custom_call.1} parent=11 // pred_fallthru
          _
        // Predicated region
        $region37: #{tpu_custom_call.1} parent=11 // pred_check
          %p327 = pneg %p246
        $region38: #{tpu_custom_call.1} parent=11 // pred_check_branch
          %329 = sbr.rel (%p327) target = $region40
        $region39: #{tpu_custom_call.1} parent=11 // pred_region
          _
        $region40: #{tpu_custom_call.1} parent=11 // pred_fallthru
          _
      $region12: #{tpu_custom_call.1} parent=5 // pred_fallthru
        _
      %p330 = scmp.lt.s32.totalorder %s21, 2
      // Predicated region
      $region41: #{tpu_custom_call.1} parent=5 // pred_check
        %p331 = pneg %p330
      $region42: #{tpu_custom_call.1} parent=5 // pred_check_branch
        %333 = sbr.rel (%p331) target = $region44
      $region43: #{tpu_custom_call.1} parent=5 // pred_region
        // Predicated region
        $region45: #{tpu_custom_call.1} parent=43 // pred_check
          %p334 = pneg %p41
        $region46: #{tpu_custom_call.1} parent=43 // pred_check_branch
          %336 = sbr.rel (%p334) target = $region48
        $region47: #{tpu_custom_call.1} parent=43 // pred_region
          %p337 = scmp.lt.s32.totalorder %s21, 1
          %s338 = scalar_select %p337, %s21, 1
          %s339 = smul.addr %s338, 8
          %s340 = scalar_lea.vmem %s0, %s339
        $region48: #{tpu_custom_call.1} parent=43 // pred_fallthru
          _
        // Predicated region
        $region49: #{tpu_custom_call.1} parent=43 // pred_check
          %p341 = pneg %p67
        $region50: #{tpu_custom_call.1} parent=43 // pred_check_branch
          %343 = sbr.rel (%p341) target = $region52
        $region51: #{tpu_custom_call.1} parent=43 // pred_region
          %p344 = scmp.lt.s32.totalorder %s21, 1
          %s345 = scalar_select %p344, %s21, 1
          %s346 = smul.addr %s345, 8
          %s347 = scalar_lea.vmem %s1, %s346
        $region52: #{tpu_custom_call.1} parent=43 // pred_fallthru
          _
        // Predicated region
        $region53: #{tpu_custom_call.1} parent=43 // pred_check
          %p348 = pneg %p93
        $region54: #{tpu_custom_call.1} parent=43 // pred_check_branch
          %350 = sbr.rel (%p348) target = $region56
        $region55: #{tpu_custom_call.1} parent=43 // pred_region
          %p351 = scmp.lt.s32.totalorder %s21, 1
          %s352 = scalar_select %p351, %s21, 1
          %s353 = scalar_lea.vmem %s2, %s352
        $region56: #{tpu_custom_call.1} parent=43 // pred_fallthru
          _
      $region44: #{tpu_custom_call.1} parent=5 // pred_fallthru
        _
      %p354 = scmp.le.s32.totalorder 1, %s21
      %p355 = scmp.lt.s32.totalorder %s21, 3
      %p356 = pnand %p354, %p355
      %p357 = pneg %p356
      // Predicated region
      $region57: #{tpu_custom_call.1} parent=5 // pred_check
        _
      $region58: #{tpu_custom_call.1} parent=5 // pred_check_branch
        %359 = sbr.rel (%p356) target = $region60
      $region59: #{tpu_custom_call.1} parent=5 // pred_region
        %s360 = ssub.s32 %s21, 1
        // Predicated region
        $region61: #{tpu_custom_call.1} parent=59 // pred_check
          %p361 = pneg %p141
        $region62: #{tpu_custom_call.1} parent=59 // pred_check_branch
          %363 = sbr.rel (%p361) target = $region64
        $region63: #{tpu_custom_call.1} parent=59 // pred_region
          %365 = dma.done [#allocation3], 1024
        $region64: #{tpu_custom_call.1} parent=59 // pred_fallthru
          _
        // Predicated region
        $region65: #{tpu_custom_call.1} parent=59 // pred_check
          %p366 = pneg %p183
        $region66: #{tpu_custom_call.1} parent=59 // pred_check_branch
          %368 = sbr.rel (%p366) target = $region68
        $region67: #{tpu_custom_call.1} parent=59 // pred_region
          %370 = dma.done [#allocation6], 1024
        $region68: #{tpu_custom_call.1} parent=59 // pred_fallthru
          _
        %p371 = scmp.lt.s32.totalorder %s26, 1
        %s372 = scalar_select %p371, %s26, 1
        %s373 = smul.addr %s372, 8
        %s374 = scalar_lea.vmem %s0, %s373
        %p375 = pneg %p47
        %p376 = pneg %p44
        %p377 = scmp.lt.s32.totalorder %s26, 1
        %s378 = scalar_select %p377, %s26, 1
        %s379 = smul.addr %s378, 8
        %s380 = scalar_lea.vmem %s1, %s379
        %p381 = pneg %p73
        %p382 = pneg %p70
        %p383 = scmp.lt.s32.totalorder %s26, 1
        %s384 = scalar_select %p383, %s26, 1
        %s385 = scalar_lea.vmem %s2, %s384
        %p386 = pneg %p99
        %p387 = pneg %p96
        %p388 = pneg %p120
        %p389 = pneg %p117
        %p390 = pneg %p141
        %p391 = pneg %p138
        %p392 = pneg %p162
        %p393 = pneg %p159
        %p394 = pneg %p183
        %p395 = pneg %p180
        %p396 = pneg %p204
        %p397 = pneg %p201
        %p398 = pneg %p225
        %p399 = pneg %p222
        %p400 = pneg %p246
        %p401 = pneg %p243
        %p402 = pneg %p272
        %p403 = pneg %p269
        %s404 = sand.u32 %s259, 1
        %s405 = scalar_lea.sflag [#allocation4], %s404
        %s406 = sand.u32 %s259, 1
        %s407 = scalar_lea.vmem [#allocation7], %s406
        %p408 = scmp.lt.s32.totalorder %s26, 1
        %s409 = scalar_select %p408, %s26, 1
        %s410 = smul.addr %s409, 8
        %s411 = scalar_lea.vmem %s0, %s410
        %p412 = scmp.lt.s32.totalorder %s26, 1
        %s413 = scalar_select %p412, %s26, 1
        %s414 = smul.addr %s413, 8
        %s415 = scalar_lea.vmem %s1, %s414
        %p416 = scmp.lt.s32.totalorder %s26, 1
        %s417 = scalar_select %p416, %s26, 1
        %s418 = scalar_lea.vmem %s2, %s417
        %v420 = vld [vmem:[%s411] sm:$0xff]
        %v421 = vlaneseq
        %v422 = vand.u32 %v421, 127
        %423 = vset.pattern.permute.xlu0 0
        %424 = vperm.xlu0 %423, %v420
        %v425 = vpop.permute.xlu0 %424
        %vm426 = vcmp.eq.s32.totalorder %v425, %v422
        %v427 = vsel %vm426, 1, 0
        %v428 = vcvt.s32.f32 %v427
        %v429 = vld [vmem:[%s3] sm:$0xff]
        %v430 = vld [vmem:[%s3 + $0x8] sm:$0xff]
        %vm431 = vcmask 130048
        %v433 = vsel %vm431, %v428, 0
        %435 = vmatpush.msra.mxu0 0.0
        %436 = vmatpush.msra.mxu0 0.0
        %437 = vmatpush.msra.mxu0 0.0
        %438 = vmatpush.msra.mxu0 0.0
        %439 = vmatpush.msra.mxu0 0.0
        %440 = vmatpush.msra.mxu0 0.0
        %441 = vmatpush.msra.mxu0 0.0
        %442 = vmatpush.msra.mxu0 0.0
        %443 = vmatpush.msra.mxu0 0.0
        %444 = vmatpush.msra.mxu0 0.0
        %445 = vmatpush.msra.mxu0 0.0
        %446 = vmatpush.msra.mxu0 0.0
        %447 = vmatpush.msra.mxu0 0.0
        %448 = vmatpush.msra.mxu0 0.0
        %449 = vmatpush.msra.mxu0 %v430
        %450 = vmatpush.msra.mxu0 %v429
        %451 = vmatmul.f32.gmra.mxu0 %v433
        %v452 = vpop.f32.mrf.mxu0
        %v453 = vadd.f32 0.0, %v452
        %454 = vdwg.mxu0
        %v455 = vld [vmem:[%s415] sm:$0xff]
        %v456 = vld [vmem:[%s418] sm:$0x1]
        %458 = vset.pattern.permute.xlu0 0
        %459 = vperm.xlu0 %458, %v455
        %v460 = vpop.permute.xlu0 %459
        %v463 = vperm.slane %v456, 0
        %v465 = vmul.f32 %v460, %v463
        %vm466 = vcmp.gt.f32.partialorder %v465, 0.0
        %v467 = vld [vmem:[%s8] sm:$0x1]
        %v468 = vld [vmem:[%s9] sm:$0x1]
        %v469 = vld [vmem:[#allocation2] sm:$0xff]
        %v470 = vld [vmem:[#allocation2 + $0x8] sm:$0xff]
        %v471 = vld [vmem:[#allocation2 + $0x10] sm:$0xff]
        %v472 = vld [vmem:[#allocation2 + $0x18] sm:$0xff]
        %v473 = vld [vmem:[%s5] sm:$0x1]
        %v475 = vperm.slane %v473, 0
        %vm477 = vcmask 261120
        %v479 = vsel %vm477, %v453, 0
        %481 = vmatpush.msra.mxu0 0.0
        %482 = vmatpush.msra.mxu0 0.0
        %483 = vmatpush.msra.mxu0 0.0
        %484 = vmatpush.msra.mxu0 0.0
        %485 = vmatpush.msra.mxu0 0.0
        %486 = vmatpush.msra.mxu0 0.0
        %487 = vmatpush.msra.mxu0 0.0
        %488 = vmatpush.msra.mxu0 0.0
        %489 = vmatpush.msra.mxu0 0.0
        %490 = vmatpush.msra.mxu0 0.0
        %491 = vmatpush.msra.mxu0 0.0
        %492 = vmatpush.msra.mxu0 0.0
        %493 = vmatpush.msra.mxu0 %v472
        %494 = vmatpush.msra.mxu0 %v471
        %495 = vmatpush.msra.mxu0 %v470
        %496 = vmatpush.msra.mxu0 %v469
        %497 = vmatmul.f32.gmra.mxu0 %v479
        %v498 = vpop.f32.mrf.mxu0
        %v499 = vadd.f32 %v475, %v498
        %500 = vdwg.mxu0
        %v501 = vmax.f32 %v499, 0.0
        %v502 = vld [vmem:[#allocation5] sm:$0xff]
        %v503 = vld [vmem:[#allocation5 + $0x8] sm:$0xff]
        %v504 = vld [vmem:[#allocation5 + $0x10] sm:$0xff]
        %v505 = vld [vmem:[#allocation5 + $0x18] sm:$0xff]
        %v506 = vld [vmem:[%s7] sm:$0x1]
        %v508 = vperm.slane %v506, 0
        %510 = vmatpush.msra.mxu0 0.0
        %511 = vmatpush.msra.mxu0 0.0
        %512 = vmatpush.msra.mxu0 0.0
        %513 = vmatpush.msra.mxu0 0.0
        %514 = vmatpush.msra.mxu0 0.0
        %515 = vmatpush.msra.mxu0 0.0
        %516 = vmatpush.msra.mxu0 0.0
        %517 = vmatpush.msra.mxu0 0.0
        %518 = vmatpush.msra.mxu0 0.0
        %519 = vmatpush.msra.mxu0 0.0
        %520 = vmatpush.msra.mxu0 0.0
        %521 = vmatpush.msra.mxu0 0.0
        %522 = vmatpush.msra.mxu0 %v505
        %523 = vmatpush.msra.mxu0 %v504
        %524 = vmatpush.msra.mxu0 %v503
        %525 = vmatpush.msra.mxu0 %v502
        %526 = vmatmul.f32.gmra.mxu0 %v479
        %v527 = vpop.f32.mrf.mxu0
        %v528 = vadd.f32 %v508, %v527
        %529 = vdwg.mxu0
        %v530 = vmax.f32 %v528, 0.0
        %v531 = vmul.f32 %v501, 0.59460354
        %533 = vrot.lane.b32.xlu0 %v531, 120
        %v534 = vpop.permute.xlu0 %533
        %536 = vrot.lane.b32.xlu0 %v531, 112
        %v537 = vpop.permute.xlu0 %536
        %539 = vrot.lane.b32.xlu0 %v531, 104
        %v540 = vpop.permute.xlu0 %539
        %v542 = vrot.slane %v537, 4
        %vm543 = vcmask 1047556
        %v544 = vsel %vm543, %v542, %v531
        %v545 = vrot.slane %v531, 4
        %v546 = vsel %vm543, %v537, %v545
        %v548 = vunpack.c.l.s4 1983009808
        %v549 = vunpack.c.0.s8 %v548
        %v550 = vperm.slane %v544, %v549
        %v552 = vunpack.c.l.s4 1983009808
        %v553 = vunpack.c.0.s8 %v552
        %v554 = vperm.slane %v546, %v553
        %v555 = vrot.slane %v540, 4
        %v556 = vsel %vm543, %v555, %v534
        %v557 = vrot.slane %v534, 4
        %v558 = vsel %vm543, %v540, %v557
        %v560 = vunpack.c.l.s4 1983009808
        %v561 = vunpack.c.0.s8 %v560
        %v562 = vperm.slane %v556, %v561
        %v564 = vunpack.c.l.s4 1983009808
        %v565 = vunpack.c.0.s8 %v564
        %v566 = vperm.slane %v558, %v565
        %v567 = vrot.slane %v562, 4
        %v568 = vsel %vm543, %v567, %v550
        %v569 = vrot.slane %v550, 4
        %v570 = vsel %vm543, %v562, %v569
        %v572 = vunpack.c.l.s4 1934713408
        %v573 = vunpack.c.0.s8 %v572
        %v574 = vperm.slane %v568, %v573
        %v576 = vunpack.c.l.s4 1934713408
        %v577 = vunpack.c.0.s8 %v576
        %v578 = vperm.slane %v570, %v577
        %v579 = vrot.slane %v566, 4
        %v580 = vsel %vm543, %v579, %v554
        %v581 = vrot.slane %v554, 4
        %v582 = vsel %vm543, %v566, %v581
        %v584 = vunpack.c.l.s4 1934713408
        %v585 = vunpack.c.0.s8 %v584
        %v586 = vperm.slane %v580, %v585
        %v588 = vunpack.c.l.s4 1934713408
        %v589 = vunpack.c.0.s8 %v588
        %v590 = vperm.slane %v582, %v589
        %v591 = vrot.slane %v574, 4
        %v592 = vsel %vm543, 0.0, %v591
        %v593 = vrot.slane %v578, 4
        %v594 = vsel %vm543, 0.0, %v593
        %v595 = vrot.slane %v586, 4
        %v596 = vsel %vm543, 0.0, %v595
        %v597 = vrot.slane %v590, 4
        %v598 = vsel %vm543, 0.0, %v597
        %v599 = vsel %vm543, %v593, %v574
        %v601 = vunpack.c.l.s4 1983009808
        %v602 = vunpack.c.0.s8 %v601
        %v603 = vperm.slane %v599, %v602
        %v604 = vrot.slane %v594, 4
        %v605 = vsel %vm543, %v604, %v592
        %v607 = vunpack.c.l.s4 1983009808
        %v608 = vunpack.c.0.s8 %v607
        %v609 = vperm.slane %v605, %v608
        %v610 = vsel %vm543, %v597, %v586
        %v612 = vunpack.c.l.s4 1983009808
        %v613 = vunpack.c.0.s8 %v612
        %v614 = vperm.slane %v610, %v613
        %v615 = vrot.slane %v598, 4
        %v616 = vsel %vm543, %v615, %v596
        %v618 = vunpack.c.l.s4 1983009808
        %v619 = vunpack.c.0.s8 %v618
        %v620 = vperm.slane %v616, %v619
        %v621 = vrot.slane %v609, 4
        %v622 = vsel %vm543, %v621, %v603
        %v623 = vrot.slane %v603, 4
        %v624 = vsel %vm543, %v609, %v623
        %v626 = vunpack.c.l.s4 1934713408
        %v627 = vunpack.c.0.s8 %v626
        %v628 = vperm.slane %v622, %v627
        %v630 = vunpack.c.l.s4 1934713408
        %v631 = vunpack.c.0.s8 %v630
        %v632 = vperm.slane %v624, %v631
        %v633 = vrot.slane %v620, 4
        %v634 = vsel %vm543, %v633, %v614
        %v635 = vrot.slane %v614, 4
        %v636 = vsel %vm543, %v620, %v635
        %v638 = vunpack.c.l.s4 1934713408
        %v639 = vunpack.c.0.s8 %v638
        %v640 = vperm.slane %v634, %v639
        %v642 = vunpack.c.l.s4 1934713408
        %v643 = vunpack.c.0.s8 %v642
        %v644 = vperm.slane %v636, %v643
        %v645 = vrot.slane %v640, 4
        %v646 = vsel %vm543, %v645, %v628
        %v647 = vrot.slane %v628, 4
        %v648 = vsel %vm543, %v640, %v647
        %v649 = vrot.slane %v644, 4
        %v650 = vsel %vm543, %v649, %v632
        %v651 = vrot.slane %v632, 4
        %v652 = vsel %vm543, %v644, %v651
        %v653 = vpack.c.bf16 %v646, %v646
        %v654 = vpack.c.bf16 %v648, %v648
        %v655 = vpack.c.bf16 %v650, %v650
        %v656 = vpack.c.bf16 %v652, %v652
        %658 = vrot.lane.b32.xlu0 %v530, 120
        %v659 = vpop.permute.xlu0 %658
        %661 = vrot.lane.b32.xlu0 %v530, 112
        %v662 = vpop.permute.xlu0 %661
        %664 = vrot.lane.b32.xlu0 %v530, 104
        %v665 = vpop.permute.xlu0 %664
        %v667 = vrot.slane %v662, 4
        %v668 = vsel %vm543, %v667, %v530
        %v669 = vrot.slane %v530, 4
        %v670 = vsel %vm543, %v662, %v669
        %v672 = vunpack.c.l.s4 1983009808
        %v673 = vunpack.c.0.s8 %v672
        %v674 = vperm.slane %v668, %v673
        %v676 = vunpack.c.l.s4 1983009808
        %v677 = vunpack.c.0.s8 %v676
        %v678 = vperm.slane %v670, %v677
        %v679 = vrot.slane %v665, 4
        %v680 = vsel %vm543, %v679, %v659
        %v681 = vrot.slane %v659, 4
        %v682 = vsel %vm543, %v665, %v681
        %v684 = vunpack.c.l.s4 1983009808
        %v685 = vunpack.c.0.s8 %v684
        %v686 = vperm.slane %v680, %v685
        %v688 = vunpack.c.l.s4 1983009808
        %v689 = vunpack.c.0.s8 %v688
        %v690 = vperm.slane %v682, %v689
        %v691 = vrot.slane %v686, 4
        %v692 = vsel %vm543, %v691, %v674
        %v693 = vrot.slane %v674, 4
        %v694 = vsel %vm543, %v686, %v693
        %v696 = vunpack.c.l.s4 1934713408
        %v697 = vunpack.c.0.s8 %v696
        %v698 = vperm.slane %v692, %v697
        %v700 = vunpack.c.l.s4 1934713408
        %v701 = vunpack.c.0.s8 %v700
        %v702 = vperm.slane %v694, %v701
        %v703 = vrot.slane %v690, 4
        %v704 = vsel %vm543, %v703, %v678
        %v705 = vrot.slane %v678, 4
        %v706 = vsel %vm543, %v690, %v705
        %v708 = vunpack.c.l.s4 1934713408
        %v709 = vunpack.c.0.s8 %v708
        %v710 = vperm.slane %v704, %v709
        %v712 = vunpack.c.l.s4 1934713408
        %v713 = vunpack.c.0.s8 %v712
        %v714 = vperm.slane %v706, %v713
        %v715 = vrot.slane %v698, 4
        %v716 = vsel %vm543, 0.0, %v715
        %v717 = vrot.slane %v702, 4
        %v718 = vsel %vm543, 0.0, %v717
        %v719 = vrot.slane %v710, 4
        %v720 = vsel %vm543, 0.0, %v719
        %v721 = vrot.slane %v714, 4
        %v722 = vsel %vm543, 0.0, %v721
        %v723 = vsel %vm543, %v717, %v698
        %v725 = vunpack.c.l.s4 1983009808
        %v726 = vunpack.c.0.s8 %v725
        %v727 = vperm.slane %v723, %v726
        %v728 = vrot.slane %v718, 4
        %v729 = vsel %vm543, %v728, %v716
        %v731 = vunpack.c.l.s4 1983009808
        %v732 = vunpack.c.0.s8 %v731
        %v733 = vperm.slane %v729, %v732
        %v734 = vsel %vm543, %v721, %v710
        %v736 = vunpack.c.l.s4 1983009808
        %v737 = vunpack.c.0.s8 %v736
        %v738 = vperm.slane %v734, %v737
        %v739 = vrot.slane %v722, 4
        %v740 = vsel %vm543, %v739, %v720
        %v742 = vunpack.c.l.s4 1983009808
        %v743 = vunpack.c.0.s8 %v742
        %v744 = vperm.slane %v740, %v743
        %v745 = vrot.slane %v733, 4
        %v746 = vsel %vm543, %v745, %v727
        %v747 = vrot.slane %v727, 4
        %v748 = vsel %vm543, %v733, %v747
        %v750 = vunpack.c.l.s4 1934713408
        %v751 = vunpack.c.0.s8 %v750
        %v752 = vperm.slane %v746, %v751
        %v754 = vunpack.c.l.s4 1934713408
        %v755 = vunpack.c.0.s8 %v754
        %v756 = vperm.slane %v748, %v755
        %v757 = vrot.slane %v744, 4
        %v758 = vsel %vm543, %v757, %v738
        %v759 = vrot.slane %v738, 4
        %v760 = vsel %vm543, %v744, %v759
        %v762 = vunpack.c.l.s4 1934713408
        %v763 = vunpack.c.0.s8 %v762
        %v764 = vperm.slane %v758, %v763
        %v766 = vunpack.c.l.s4 1934713408
        %v767 = vunpack.c.0.s8 %v766
        %v768 = vperm.slane %v760, %v767
        %v769 = vrot.slane %v764, 4
        %v770 = vsel %vm543, %v769, %v752
        %v771 = vrot.slane %v752, 4
        %v772 = vsel %vm543, %v764, %v771
        %v773 = vrot.slane %v768, 4
        %v774 = vsel %vm543, %v773, %v756
        %v775 = vrot.slane %v756, 4
        %v776 = vsel %vm543, %v768, %v775
        %v777 = vpack.c.bf16 %v770, %v770
        %v778 = vpack.c.bf16 %v772, %v772
        %v779 = vpack.c.bf16 %v774, %v774
        %v780 = vpack.c.bf16 %v776, %v776
        %781 = vrot.lane.b32.xlu0 %v453, 120
        %v782 = vpop.permute.xlu0 %781
        %784 = vrot.lane.b32.xlu0 %v453, 112
        %v785 = vpop.permute.xlu0 %784
        %787 = vrot.lane.b32.xlu0 %v453, 104
        %v788 = vpop.permute.xlu0 %787
        %v790 = vrot.slane %v785, 4
        %v791 = vsel %vm543, %v790, %v453
        %v792 = vrot.slane %v453, 4
        %v793 = vsel %vm543, %v785, %v792
        %v795 = vunpack.c.l.s4 1983009808
        %v796 = vunpack.c.0.s8 %v795
        %v797 = vperm.slane %v791, %v796
        %v799 = vunpack.c.l.s4 1983009808
        %v800 = vunpack.c.0.s8 %v799
        %v801 = vperm.slane %v793, %v800
        %v802 = vrot.slane %v788, 4
        %v803 = vsel %vm543, %v802, %v782
        %v804 = vrot.slane %v782, 4
        %v805 = vsel %vm543, %v788, %v804
        %v807 = vunpack.c.l.s4 1983009808
        %v808 = vunpack.c.0.s8 %v807
        %v809 = vperm.slane %v803, %v808
        %v811 = vunpack.c.l.s4 1983009808
        %v812 = vunpack.c.0.s8 %v811
        %v813 = vperm.slane %v805, %v812
        %v814 = vrot.slane %v809, 4
        %v815 = vsel %vm543, %v814, %v797
        %v816 = vrot.slane %v797, 4
        %v817 = vsel %vm543, %v809, %v816
        %v819 = vunpack.c.l.s4 1934713408
        %v820 = vunpack.c.0.s8 %v819
        %v821 = vperm.slane %v815, %v820
        %v823 = vunpack.c.l.s4 1934713408
        %v824 = vunpack.c.0.s8 %v823
        %v825 = vperm.slane %v817, %v824
        %v826 = vrot.slane %v813, 4
        %v827 = vsel %vm543, %v826, %v801
        %v828 = vrot.slane %v801, 4
        %v829 = vsel %vm543, %v813, %v828
        %v831 = vunpack.c.l.s4 1934713408
        %v832 = vunpack.c.0.s8 %v831
        %v833 = vperm.slane %v827, %v832
        %v835 = vunpack.c.l.s4 1934713408
        %v836 = vunpack.c.0.s8 %v835
        %v837 = vperm.slane %v829, %v836
        %v838 = vrot.slane %v821, 4
        %v839 = vsel %vm543, 0.0, %v838
        %v840 = vrot.slane %v825, 4
        %v841 = vsel %vm543, 0.0, %v840
        %v842 = vrot.slane %v833, 4
        %v843 = vsel %vm543, 0.0, %v842
        %v844 = vrot.slane %v837, 4
        %v845 = vsel %vm543, 0.0, %v844
        %v846 = vsel %vm543, %v840, %v821
        %v848 = vunpack.c.l.s4 1983009808
        %v849 = vunpack.c.0.s8 %v848
        %v850 = vperm.slane %v846, %v849
        %v851 = vrot.slane %v841, 4
        %v852 = vsel %vm543, %v851, %v839
        %v854 = vunpack.c.l.s4 1983009808
        %v855 = vunpack.c.0.s8 %v854
        %v856 = vperm.slane %v852, %v855
        %v857 = vsel %vm543, %v844, %v833
        %v859 = vunpack.c.l.s4 1983009808
        %v860 = vunpack.c.0.s8 %v859
        %v861 = vperm.slane %v857, %v860
        %v862 = vrot.slane %v845, 4
        %v863 = vsel %vm543, %v862, %v843
        %v865 = vunpack.c.l.s4 1983009808
        %v866 = vunpack.c.0.s8 %v865
        %v867 = vperm.slane %v863, %v866
        %v868 = vrot.slane %v856, 4
        %v869 = vsel %vm543, %v868, %v850
        %v870 = vrot.slane %v850, 4
        %v871 = vsel %vm543, %v856, %v870
        %v873 = vunpack.c.l.s4 1934713408
        %v874 = vunpack.c.0.s8 %v873
        %v875 = vperm.slane %v869, %v874
        %v877 = vunpack.c.l.s4 1934713408
        %v878 = vunpack.c.0.s8 %v877
        %v879 = vperm.slane %v871, %v878
        %v880 = vrot.slane %v867, 4
        %v881 = vsel %vm543, %v880, %v861
        %v882 = vrot.slane %v861, 4
        %v883 = vsel %vm543, %v867, %v882
        %v885 = vunpack.c.l.s4 1934713408
        %v886 = vunpack.c.0.s8 %v885
        %v887 = vperm.slane %v881, %v886
        %v889 = vunpack.c.l.s4 1934713408
        %v890 = vunpack.c.0.s8 %v889
        %v891 = vperm.slane %v883, %v890
        %v892 = vrot.slane %v887, 4
        %v893 = vsel %vm543, %v892, %v875
        %v894 = vrot.slane %v875, 4
        %v895 = vsel %vm543, %v887, %v894
        %v896 = vrot.slane %v891, 4
        %v897 = vsel %vm543, %v896, %v879
        %v898 = vrot.slane %v879, 4
        %v899 = vsel %vm543, %v891, %v898
        %v900 = vpack.c.bf16 %v893, %v893
        %v901 = vpack.c.bf16 %v895, %v895
        %v902 = vpack.c.bf16 %v897, %v897
        %v903 = vpack.c.bf16 %v899, %v899
        %vm904 = vcmask 64512
        %v906 = vsel %vm904, %v777, 0
        %v909 = vsel %vm904, %v653, 0
        %911 = vmatpush.bf16.xpose.msra.mxu0 0
        %912 = vmatpush.bf16.xpose.msra.mxu0 0
        %913 = vmatpush.bf16.xpose.msra.mxu0 0
        %914 = vmatpush.bf16.xpose.msra.mxu0 0
        %915 = vmatpush.bf16.xpose.msra.mxu0 0
        %916 = vmatpush.bf16.xpose.msra.mxu0 0
        %917 = vmatpush.bf16.xpose.msra.mxu0 0
        %918 = vmatpush.bf16.xpose.msra.mxu0 %v909
        %919 = vmatmul.bf16.gmra.mxu0 %v906
        %v920 = vpop.f32.mrf.mxu0
        %v921 = vadd.f32 0.0, %v920
        %v922 = vpop.f32.mrf.mxu0
        %923 = vdwg.mxu0
        %v925 = vsel %vm904, %v778, 0
        %v928 = vsel %vm904, %v654, 0
        %930 = vmatpush.bf16.xpose.msra.mxu0 0
        %931 = vmatpush.bf16.xpose.msra.mxu0 0
        %932 = vmatpush.bf16.xpose.msra.mxu0 0
        %933 = vmatpush.bf16.xpose.msra.mxu0 0
        %934 = vmatpush.bf16.xpose.msra.mxu0 0
        %935 = vmatpush.bf16.xpose.msra.mxu0 0
        %936 = vmatpush.bf16.xpose.msra.mxu0 0
        %937 = vmatpush.bf16.xpose.msra.mxu0 %v928
        %938 = vmatmul.bf16.gmra.mxu0 %v925
        %v939 = vpop.f32.mrf.mxu0
        %v940 = vadd.f32 0.0, %v939
        %v941 = vpop.f32.mrf.mxu0
        %942 = vdwg.mxu0
        %v944 = vsel %vm904, %v779, 0
        %v947 = vsel %vm904, %v655, 0
        %949 = vmatpush.bf16.xpose.msra.mxu0 0
        %950 = vmatpush.bf16.xpose.msra.mxu0 0
        %951 = vmatpush.bf16.xpose.msra.mxu0 0
        %952 = vmatpush.bf16.xpose.msra.mxu0 0
        %953 = vmatpush.bf16.xpose.msra.mxu0 0
        %954 = vmatpush.bf16.xpose.msra.mxu0 0
        %955 = vmatpush.bf16.xpose.msra.mxu0 0
        %956 = vmatpush.bf16.xpose.msra.mxu0 %v947
        %957 = vmatmul.bf16.gmra.mxu0 %v944
        %v958 = vpop.f32.mrf.mxu0
        %v959 = vadd.f32 0.0, %v958
        %v960 = vpop.f32.mrf.mxu0
        %961 = vdwg.mxu0
        %v963 = vsel %vm904, %v780, 0
        %v966 = vsel %vm904, %v656, 0
        %968 = vmatpush.bf16.xpose.msra.mxu0 0
        %969 = vmatpush.bf16.xpose.msra.mxu0 0
        %970 = vmatpush.bf16.xpose.msra.mxu0 0
        %971 = vmatpush.bf16.xpose.msra.mxu0 0
        %972 = vmatpush.bf16.xpose.msra.mxu0 0
        %973 = vmatpush.bf16.xpose.msra.mxu0 0
        %974 = vmatpush.bf16.xpose.msra.mxu0 0
        %975 = vmatpush.bf16.xpose.msra.mxu0 %v966
        %976 = vmatmul.bf16.gmra.mxu0 %v963
        %v977 = vpop.f32.mrf.mxu0
        %v978 = vadd.f32 0.0, %v977
        %v979 = vpop.f32.mrf.mxu0
        %980 = vdwg.mxu0
        %v981 = vsel %vm466, 1, 0
        %vm982 = vcmp.eq.s32.totalorder %v981, 1
        %v983 = vsel %vm982, %v921, -10000000.0
        %v984 = vsel %vm982, %v940, -10000000.0
        %v985 = vsel %vm982, %v959, -10000000.0
        %v986 = vsel %vm982, %v978, -10000000.0
        %v987 = vsel %vm904, %v983, -inf
        %988 = vmax.xlane.f32.xlu0 %v987
        %v989 = vpop.xlane.xlu0 %988
        %v990 = vsel %vm904, %v984, -inf
        %991 = vmax.xlane.f32.xlu0 %v990
        %v992 = vpop.xlane.xlu0 %991
        %v993 = vsel %vm904, %v985, -inf
        %994 = vmax.xlane.f32.xlu0 %v993
        %v995 = vpop.xlane.xlu0 %994
        %v996 = vsel %vm904, %v986, -inf
        %997 = vmax.xlane.f32.xlu0 %v996
        %v998 = vpop.xlane.xlu0 %997
        %v999 = vsub.f32 %v983, %v989
        %v1000 = vsub.f32 %v984, %v992
        %v1001 = vsub.f32 %v985, %v995
        %v1002 = vsub.f32 %v986, %v998
        %v1003 = vmul.f32 %v999, 1.442695
        %v1004 = vpow.pop %v1003
        %v1005 = vmul.f32 %v1000, 1.442695
        %v1006 = vpow.pop %v1005
        %v1007 = vmul.f32 %v1001, 1.442695
        %v1008 = vpow.pop %v1007
        %v1009 = vmul.f32 %v1002, 1.442695
        %v1010 = vpow.pop %v1009
        %v1011 = vsel %vm904, %v1004, 0.0
        %1012 = vadd.xlane.f32.xlu0 %v1011
        %v1013 = vpop.xlane.xlu0 %1012
        %v1014 = vsel %vm904, %v1006, 0.0
        %1015 = vadd.xlane.f32.xlu0 %v1014
        %v1016 = vpop.xlane.xlu0 %1015
        %v1017 = vsel %vm904, %v1008, 0.0
        %1018 = vadd.xlane.f32.xlu0 %v1017
        %v1019 = vpop.xlane.xlu0 %1018
        %v1020 = vsel %vm904, %v1010, 0.0
        %1021 = vadd.xlane.f32.xlu0 %v1020
        %v1022 = vpop.xlane.xlu0 %1021
        %v1023 = vrcp.pop %v1013
        %v1024 = vrcp.pop %v1016
        %v1025 = vrcp.pop %v1019
        %v1026 = vrcp.pop %v1022
        %v1027 = vmul.f32 %v1004, %v1023
        %v1028 = vmul.f32 %v1006, %v1024
        %v1029 = vmul.f32 %v1008, %v1025
        %v1030 = vmul.f32 %v1010, %v1026
        %v1031 = vpack.c.bf16 %v1027, %v1027
        %v1032 = vpack.c.bf16 %v1028, %v1028
        %v1033 = vpack.c.bf16 %v1029, %v1029
        %v1034 = vpack.c.bf16 %v1030, %v1030
        %v1036 = vsel %vm904, %v1031, 0
        %vm1038 = vcmask 1043456
        %v1040 = vsel %vm1038, %v900, 0
        %1042 = vmatpush.bf16.msra.mxu0 0
        %1043 = vmatpush.bf16.msra.mxu0 0
        %1044 = vmatpush.bf16.msra.mxu0 0
        %1045 = vmatpush.bf16.msra.mxu0 0
        %1046 = vmatpush.bf16.msra.mxu0 0
        %1047 = vmatpush.bf16.msra.mxu0 0
        %1048 = vmatpush.bf16.msra.mxu0 0
        %1049 = vmatpush.bf16.msra.mxu0 %v1040
        %1050 = vmatmul.bf16.gmra.mxu0 %v1036
        %v1051 = vpop.f32.mrf.mxu0
        %v1052 = vadd.f32 0.0, %v1051
        %v1053 = vpop.f32.mrf.mxu0
        %1054 = vdwg.mxu0
        %v1056 = vsel %vm904, %v1032, 0
        %v1059 = vsel %vm1038, %v901, 0
        %1061 = vmatpush.bf16.msra.mxu0 0
        %1062 = vmatpush.bf16.msra.mxu0 0
        %1063 = vmatpush.bf16.msra.mxu0 0
        %1064 = vmatpush.bf16.msra.mxu0 0
        %1065 = vmatpush.bf16.msra.mxu0 0
        %1066 = vmatpush.bf16.msra.mxu0 0
        %1067 = vmatpush.bf16.msra.mxu0 0
        %1068 = vmatpush.bf16.msra.mxu0 %v1059
        %1069 = vmatmul.bf16.gmra.mxu0 %v1056
        %v1070 = vpop.f32.mrf.mxu0
        %v1071 = vadd.f32 0.0, %v1070
        %v1072 = vpop.f32.mrf.mxu0
        %1073 = vdwg.mxu0
        %v1075 = vsel %vm904, %v1033, 0
        %v1078 = vsel %vm1038, %v902, 0
        %1080 = vmatpush.bf16.msra.mxu0 0
        %1081 = vmatpush.bf16.msra.mxu0 0
        %1082 = vmatpush.bf16.msra.mxu0 0
        %1083 = vmatpush.bf16.msra.mxu0 0
        %1084 = vmatpush.bf16.msra.mxu0 0
        %1085 = vmatpush.bf16.msra.mxu0 0
        %1086 = vmatpush.bf16.msra.mxu0 0
        %1087 = vmatpush.bf16.msra.mxu0 %v1078
        %1088 = vmatmul.bf16.gmra.mxu0 %v1075
        %v1089 = vpop.f32.mrf.mxu0
        %v1090 = vadd.f32 0.0, %v1089
        %v1091 = vpop.f32.mrf.mxu0
        %1092 = vdwg.mxu0
        %v1094 = vsel %vm904, %v1034, 0
        %v1097 = vsel %vm1038, %v903, 0
        %1099 = vmatpush.bf16.msra.mxu0 0
        %1100 = vmatpush.bf16.msra.mxu0 0
        %1101 = vmatpush.bf16.msra.mxu0 0
        %1102 = vmatpush.bf16.msra.mxu0 0
        %1103 = vmatpush.bf16.msra.mxu0 0
        %1104 = vmatpush.bf16.msra.mxu0 0
        %1105 = vmatpush.bf16.msra.mxu0 0
        %1106 = vmatpush.bf16.msra.mxu0 %v1097
        %1107 = vmatmul.bf16.gmra.mxu0 %v1094
        %v1108 = vpop.f32.mrf.mxu0
        %v1109 = vadd.f32 0.0, %v1108
        %v1110 = vpop.f32.mrf.mxu0
        %1111 = vdwg.mxu0
        %v1112 = vrot.slane %v1090, 4
        %v1113 = vsel %vm543, %v1112, %v1052
        %v1114 = vrot.slane %v1052, 4
        %v1115 = vsel %vm543, %v1090, %v1114
        %v1117 = vunpack.c.l.s4 1983009808
        %v1118 = vunpack.c.0.s8 %v1117
        %v1119 = vperm.slane %v1113, %v1118
        %v1121 = vunpack.c.l.s4 1983009808
        %v1122 = vunpack.c.0.s8 %v1121
        %v1123 = vperm.slane %v1115, %v1122
        %v1124 = vrot.slane %v1109, 4
        %v1125 = vsel %vm543, %v1124, %v1071
        %v1126 = vrot.slane %v1071, 4
        %v1127 = vsel %vm543, %v1109, %v1126
        %v1129 = vunpack.c.l.s4 1983009808
        %v1130 = vunpack.c.0.s8 %v1129
        %v1131 = vperm.slane %v1125, %v1130
        %v1133 = vunpack.c.l.s4 1983009808
        %v1134 = vunpack.c.0.s8 %v1133
        %v1135 = vperm.slane %v1127, %v1134
        %v1136 = vrot.slane %v1131, 4
        %v1137 = vsel %vm543, %v1136, %v1119
        %v1138 = vrot.slane %v1119, 4
        %v1139 = vsel %vm543, %v1131, %v1138
        %v1141 = vunpack.c.l.s4 1934713408
        %v1142 = vunpack.c.0.s8 %v1141
        %v1143 = vperm.slane %v1137, %v1142
        %v1145 = vunpack.c.l.s4 1934713408
        %v1146 = vunpack.c.0.s8 %v1145
        %v1147 = vperm.slane %v1139, %v1146
        %v1148 = vrot.slane %v1135, 4
        %v1149 = vsel %vm543, %v1148, %v1123
        %v1150 = vrot.slane %v1123, 4
        %v1151 = vsel %vm543, %v1135, %v1150
        %v1153 = vunpack.c.l.s4 1934713408
        %v1154 = vunpack.c.0.s8 %v1153
        %v1155 = vperm.slane %v1149, %v1154
        %v1157 = vunpack.c.l.s4 1934713408
        %v1158 = vunpack.c.0.s8 %v1157
        %v1159 = vperm.slane %v1151, %v1158
        %v1160 = vrot.slane %v1143, 4
        %v1161 = vsel %vm543, 0.0, %v1160
        %v1162 = vrot.slane %v1147, 4
        %v1163 = vsel %vm543, 0.0, %v1162
        %v1164 = vrot.slane %v1155, 4
        %v1165 = vsel %vm543, 0.0, %v1164
        %v1166 = vrot.slane %v1159, 4
        %v1167 = vsel %vm543, 0.0, %v1166
        %v1168 = vsel %vm543, %v1162, %v1143
        %v1170 = vunpack.c.l.s4 1983009808
        %v1171 = vunpack.c.0.s8 %v1170
        %v1172 = vperm.slane %v1168, %v1171
        %v1173 = vrot.slane %v1163, 4
        %v1174 = vsel %vm543, %v1173, %v1161
        %v1176 = vunpack.c.l.s4 1983009808
        %v1177 = vunpack.c.0.s8 %v1176
        %v1178 = vperm.slane %v1174, %v1177
        %v1179 = vsel %vm543, %v1166, %v1155
        %v1181 = vunpack.c.l.s4 1983009808
        %v1182 = vunpack.c.0.s8 %v1181
        %v1183 = vperm.slane %v1179, %v1182
        %v1184 = vrot.slane %v1167, 4
        %v1185 = vsel %vm543, %v1184, %v1165
        %v1187 = vunpack.c.l.s4 1983009808
        %v1188 = vunpack.c.0.s8 %v1187
        %v1189 = vperm.slane %v1185, %v1188
        %v1190 = vrot.slane %v1178, 4
        %v1191 = vsel %vm543, %v1190, %v1172
        %v1192 = vrot.slane %v1172, 4
        %v1193 = vsel %vm543, %v1178, %v1192
        %v1195 = vunpack.c.l.s4 1934713408
        %v1196 = vunpack.c.0.s8 %v1195
        %v1197 = vperm.slane %v1191, %v1196
        %v1199 = vunpack.c.l.s4 1934713408
        %v1200 = vunpack.c.0.s8 %v1199
        %v1201 = vperm.slane %v1193, %v1200
        %v1202 = vrot.slane %v1189, 4
        %v1203 = vsel %vm543, %v1202, %v1183
        %v1204 = vrot.slane %v1183, 4
        %v1205 = vsel %vm543, %v1189, %v1204
        %v1207 = vunpack.c.l.s4 1934713408
        %v1208 = vunpack.c.0.s8 %v1207
        %v1209 = vperm.slane %v1203, %v1208
        %v1211 = vunpack.c.l.s4 1934713408
        %v1212 = vunpack.c.0.s8 %v1211
        %v1213 = vperm.slane %v1205, %v1212
        %v1214 = vrot.slane %v1209, 4
        %v1215 = vsel %vm543, %v1214, %v1197
        %v1216 = vrot.slane %v1197, 4
        %v1217 = vsel %vm543, %v1209, %v1216
        %v1218 = vrot.slane %v1213, 4
        %v1219 = vsel %vm543, %v1218, %v1201
        %v1220 = vrot.slane %v1201, 4
        %v1221 = vsel %vm543, %v1213, %v1220
        %1223 = vrot.lane.b32.xlu0 %v1217, 8
        %v1224 = vpop.permute.xlu0 %1223
        %1227 = vrot.lane.b32.xlu0 %v1219, 16
        %v1228 = vpop.permute.xlu0 %1227
        %1231 = vrot.lane.b32.xlu0 %v1221, 24
        %v1232 = vpop.permute.xlu0 %1231
        %v1234 = vsel %vm904, %v1215, %v1224
        %v1235 = vsel %vm431, %v1234, %v1228
        %vm1236 = vcmask 195584
        %v1237 = vsel %vm1236, %v1235, %v1232
        %v1238 = vsel %vm477, %v1237, 0.0
        %1239 = vadd.xlane.f32.xlu0 %v1238
        %v1240 = vpop.xlane.xlu0 %1239
        %v1241 = vrcp.pop 32.0
        %v1242 = vmul.f32 32.0, %v1241
        %v1243 = vsub.f32 1.0, %v1242
        %v1244 = vmul.f32 %v1241, %v1243
        %v1245 = vadd.f32 %v1241, %v1244
        %vm1246 = vweird.f32 %v1241
        %v1247 = vsel %vm1246, %v1241, %v1245
        %v1248 = vmul.f32 %v1240, %v1247
        %v1249 = vsub.f32 %v1237, %v1248
        %v1250 = vmul.f32 %v1249, %v1249
        %v1251 = vsel %vm477, %v1250, 0.0
        %1252 = vadd.xlane.f32.xlu0 %v1251
        %v1253 = vpop.xlane.xlu0 %1252
        %v1254 = vrcp.pop 31.0
        %v1255 = vmul.f32 31.0, %v1254
        %v1256 = vsub.f32 1.0, %v1255
        %v1257 = vmul.f32 %v1254, %v1256
        %v1258 = vadd.f32 %v1254, %v1257
        %vm1259 = vweird.f32 %v1254
        %v1260 = vsel %vm1259, %v1254, %v1258
        %v1261 = vmul.f32 %v1253, %v1260
        %v1262 = vrsqrt.pop %v1261
        %v1263 = vmul.f32 %v1262, %v1261
        %v1264 = vmul.f32 %v1263, %v1262
        %v1265 = vmul.f32 0.5, %v1264
        %v1266 = vsub.f32 1.5, %v1265
        %v1267 = vmul.f32 %v1262, %v1266
        %v1268 = vmul.f32 %v1261, %v1267
        %vm1269 = vcmp.eq.f32.partialorder %v1261, inf
        %v1270 = vsel %vm1269, %v1261, %v1268
        %vm1271 = vcmp.eq.f32.partialorder %v1261, 0.0
        %v1272 = vand.u32 %v1261, 2147483648
        %v1273 = vsel %vm1271, %v1272, %v1270
        %v1274 = vadd.f32 %v1273, 1e-06
        %v1275 = vrcp.pop %v1274
        %v1277 = vperm.slane %v467, 0
        %v1279 = vmul.f32 %v1277, %v1249
        %v1280 = vmul.f32 %v1279, %v1275
        %v1281 = vadd.f32 %v453, %v1280
        %v1283 = vperm.slane %v468, 0
        %v1285 = vadd.f32 %v1281, %v1283
        %s1286 = scalar_lea.vmem [#allocation2], 32
        %v1287 = vld [vmem:[%s1286] sm:$0xff]
        %v1288 = vld [vmem:[%s1286 + $0x8] sm:$0xff]
        %v1289 = vld [vmem:[%s1286 + $0x10] sm:$0xff]
        %v1290 = vld [vmem:[%s1286 + $0x18] sm:$0xff]
        %s1291 = scalar_lea.vmem %s5, 1
        %v1292 = vld [vmem:[%s1291] sm:$0x1]
        %v1294 = vperm.slane %v1292, 0
        %v1297 = vsel %vm477, %v1285, 0
        %1299 = vmatpush.msra.mxu0 0.0
        %1300 = vmatpush.msra.mxu0 0.0
        %1301 = vmatpush.msra.mxu0 0.0
        %1302 = vmatpush.msra.mxu0 0.0
        %1303 = vmatpush.msra.mxu0 0.0
        %1304 = vmatpush.msra.mxu0 0.0
        %1305 = vmatpush.msra.mxu0 0.0
        %1306 = vmatpush.msra.mxu0 0.0
        %1307 = vmatpush.msra.mxu0 0.0
        %1308 = vmatpush.msra.mxu0 0.0
        %1309 = vmatpush.msra.mxu0 0.0
        %1310 = vmatpush.msra.mxu0 0.0
        %1311 = vmatpush.msra.mxu0 %v1290
        %1312 = vmatpush.msra.mxu0 %v1289
        %1313 = vmatpush.msra.mxu0 %v1288
        %1314 = vmatpush.msra.mxu0 %v1287
        %1315 = vmatmul.f32.gmra.mxu0 %v1297
        %v1316 = vpop.f32.mrf.mxu0
        %v1317 = vadd.f32 %v1294, %v1316
        %1318 = vdwg.mxu0
        %v1319 = vmax.f32 %v1317, 0.0
        %s1320 = scalar_lea.vmem [#allocation5], 32
        %v1321 = vld [vmem:[%s1320] sm:$0xff]
        %v1322 = vld [vmem:[%s1320 + $0x8] sm:$0xff]
        %v1323 = vld [vmem:[%s1320 + $0x10] sm:$0xff]
        %v1324 = vld [vmem:[%s1320 + $0x18] sm:$0xff]
        %s1325 = scalar_lea.vmem %s7, 1
        %v1326 = vld [vmem:[%s1325] sm:$0x1]
        %v1328 = vperm.slane %v1326, 0
        %1330 = vmatpush.msra.mxu0 0.0
        %1331 = vmatpush.msra.mxu0 0.0
        %1332 = vmatpush.msra.mxu0 0.0
        %1333 = vmatpush.msra.mxu0 0.0
        %1334 = vmatpush.msra.mxu0 0.0
        %1335 = vmatpush.msra.mxu0 0.0
        %1336 = vmatpush.msra.mxu0 0.0
        %1337 = vmatpush.msra.mxu0 0.0
        %1338 = vmatpush.msra.mxu0 0.0
        %1339 = vmatpush.msra.mxu0 0.0
        %1340 = vmatpush.msra.mxu0 0.0
        %1341 = vmatpush.msra.mxu0 0.0
        %1342 = vmatpush.msra.mxu0 %v1324
        %1343 = vmatpush.msra.mxu0 %v1323
        %1344 = vmatpush.msra.mxu0 %v1322
        %1345 = vmatpush.msra.mxu0 %v1321
        %1346 = vmatmul.f32.gmra.mxu0 %v1297
        %v1347 = vpop.f32.mrf.mxu0
        %v1348 = vadd.f32 %v1328, %v1347
        %1349 = vdwg.mxu0
        %v1350 = vmax.f32 %v1348, 0.0
        %v1351 = vmul.f32 %v1319, 0.59460354
        %1353 = vrot.lane.b32.xlu0 %v1351, 120
        %v1354 = vpop.permute.xlu0 %1353
        %1356 = vrot.lane.b32.xlu0 %v1351, 112
        %v1357 = vpop.permute.xlu0 %1356
        %1359 = vrot.lane.b32.xlu0 %v1351, 104
        %v1360 = vpop.permute.xlu0 %1359
        %v1362 = vrot.slane %v1357, 4
        %v1363 = vsel %vm543, %v1362, %v1351
        %v1364 = vrot.slane %v1351, 4
        %v1365 = vsel %vm543, %v1357, %v1364
        %v1367 = vunpack.c.l.s4 1983009808
        %v1368 = vunpack.c.0.s8 %v1367
        %v1369 = vperm.slane %v1363, %v1368
        %v1371 = vunpack.c.l.s4 1983009808
        %v1372 = vunpack.c.0.s8 %v1371
        %v1373 = vperm.slane %v1365, %v1372
        %v1374 = vrot.slane %v1360, 4
        %v1375 = vsel %vm543, %v1374, %v1354
        %v1376 = vrot.slane %v1354, 4
        %v1377 = vsel %vm543, %v1360, %v1376
        %v1379 = vunpack.c.l.s4 1983009808
        %v1380 = vunpack.c.0.s8 %v1379
        %v1381 = vperm.slane %v1375, %v1380
        %v1383 = vunpack.c.l.s4 1983009808
        %v1384 = vunpack.c.0.s8 %v1383
        %v1385 = vperm.slane %v1377, %v1384
        %v1386 = vrot.slane %v1381, 4
        %v1387 = vsel %vm543, %v1386, %v1369
        %v1388 = vrot.slane %v1369, 4
        %v1389 = vsel %vm543, %v1381, %v1388
        %v1391 = vunpack.c.l.s4 1934713408
        %v1392 = vunpack.c.0.s8 %v1391
        %v1393 = vperm.slane %v1387, %v1392
        %v1395 = vunpack.c.l.s4 1934713408
        %v1396 = vunpack.c.0.s8 %v1395
        %v1397 = vperm.slane %v1389, %v1396
        %v1398 = vrot.slane %v1385, 4
        %v1399 = vsel %vm543, %v1398, %v1373
        %v1400 = vrot.slane %v1373, 4
        %v1401 = vsel %vm543, %v1385, %v1400
        %v1403 = vunpack.c.l.s4 1934713408
        %v1404 = vunpack.c.0.s8 %v1403
        %v1405 = vperm.slane %v1399, %v1404
        %v1407 = vunpack.c.l.s4 1934713408
        %v1408 = vunpack.c.0.s8 %v1407
        %v1409 = vperm.slane %v1401, %v1408
        %v1410 = vrot.slane %v1393, 4
        %v1411 = vsel %vm543, 0.0, %v1410
        %v1412 = vrot.slane %v1397, 4
        %v1413 = vsel %vm543, 0.0, %v1412
        %v1414 = vrot.slane %v1405, 4
        %v1415 = vsel %vm543, 0.0, %v1414
        %v1416 = vrot.slane %v1409, 4
        %v1417 = vsel %vm543, 0.0, %v1416
        %v1418 = vsel %vm543, %v1412, %v1393
        %v1420 = vunpack.c.l.s4 1983009808
        %v1421 = vunpack.c.0.s8 %v1420
        %v1422 = vperm.slane %v1418, %v1421
        %v1423 = vrot.slane %v1413, 4
        %v1424 = vsel %vm543, %v1423, %v1411
        %v1426 = vunpack.c.l.s4 1983009808
        %v1427 = vunpack.c.0.s8 %v1426
        %v1428 = vperm.slane %v1424, %v1427
        %v1429 = vsel %vm543, %v1416, %v1405
        %v1431 = vunpack.c.l.s4 1983009808
        %v1432 = vunpack.c.0.s8 %v1431
        %v1433 = vperm.slane %v1429, %v1432
        %v1434 = vrot.slane %v1417, 4
        %v1435 = vsel %vm543, %v1434, %v1415
        %v1437 = vunpack.c.l.s4 1983009808
        %v1438 = vunpack.c.0.s8 %v1437
        %v1439 = vperm.slane %v1435, %v1438
        %v1440 = vrot.slane %v1428, 4
        %v1441 = vsel %vm543, %v1440, %v1422
        %v1442 = vrot.slane %v1422, 4
        %v1443 = vsel %vm543, %v1428, %v1442
        %v1445 = vunpack.c.l.s4 1934713408
        %v1446 = vunpack.c.0.s8 %v1445
        %v1447 = vperm.slane %v1441, %v1446
        %v1449 = vunpack.c.l.s4 1934713408
        %v1450 = vunpack.c.0.s8 %v1449
        %v1451 = vperm.slane %v1443, %v1450
        %v1452 = vrot.slane %v1439, 4
        %v1453 = vsel %vm543, %v1452, %v1433
        %v1454 = vrot.slane %v1433, 4
        %v1455 = vsel %vm543, %v1439, %v1454
        %v1457 = vunpack.c.l.s4 1934713408
        %v1458 = vunpack.c.0.s8 %v1457
        %v1459 = vperm.slane %v1453, %v1458
        %v1461 = vunpack.c.l.s4 1934713408
        %v1462 = vunpack.c.0.s8 %v1461
        %v1463 = vperm.slane %v1455, %v1462
        %v1464 = vrot.slane %v1459, 4
        %v1465 = vsel %vm543, %v1464, %v1447
        %v1466 = vrot.slane %v1447, 4
        %v1467 = vsel %vm543, %v1459, %v1466
        %v1468 = vrot.slane %v1463, 4
        %v1469 = vsel %vm543, %v1468, %v1451
        %v1470 = vrot.slane %v1451, 4
        %v1471 = vsel %vm543, %v1463, %v1470
        %v1472 = vpack.c.bf16 %v1465, %v1465
        %v1473 = vpack.c.bf16 %v1467, %v1467
        %v1474 = vpack.c.bf16 %v1469, %v1469
        %v1475 = vpack.c.bf16 %v1471, %v1471
        %1477 = vrot.lane.b32.xlu0 %v1350, 120
        %v1478 = vpop.permute.xlu0 %1477
        %1480 = vrot.lane.b32.xlu0 %v1350, 112
        %v1481 = vpop.permute.xlu0 %1480
        %1483 = vrot.lane.b32.xlu0 %v1350, 104
        %v1484 = vpop.permute.xlu0 %1483
        %v1486 = vrot.slane %v1481, 4
        %v1487 = vsel %vm543, %v1486, %v1350
        %v1488 = vrot.slane %v1350, 4
        %v1489 = vsel %vm543, %v1481, %v1488
        %v1491 = vunpack.c.l.s4 1983009808
        %v1492 = vunpack.c.0.s8 %v1491
        %v1493 = vperm.slane %v1487, %v1492
        %v1495 = vunpack.c.l.s4 1983009808
        %v1496 = vunpack.c.0.s8 %v1495
        %v1497 = vperm.slane %v1489, %v1496
        %v1498 = vrot.slane %v1484, 4
        %v1499 = vsel %vm543, %v1498, %v1478
        %v1500 = vrot.slane %v1478, 4
        %v1501 = vsel %vm543, %v1484, %v1500
        %v1503 = vunpack.c.l.s4 1983009808
        %v1504 = vunpack.c.0.s8 %v1503
        %v1505 = vperm.slane %v1499, %v1504
        %v1507 = vunpack.c.l.s4 1983009808
        %v1508 = vunpack.c.0.s8 %v1507
        %v1509 = vperm.slane %v1501, %v1508
        %v1510 = vrot.slane %v1505, 4
        %v1511 = vsel %vm543, %v1510, %v1493
        %v1512 = vrot.slane %v1493, 4
        %v1513 = vsel %vm543, %v1505, %v1512
        %v1515 = vunpack.c.l.s4 1934713408
        %v1516 = vunpack.c.0.s8 %v1515
        %v1517 = vperm.slane %v1511, %v1516
        %v1519 = vunpack.c.l.s4 1934713408
        %v1520 = vunpack.c.0.s8 %v1519
        %v1521 = vperm.slane %v1513, %v1520
        %v1522 = vrot.slane %v1509, 4
        %v1523 = vsel %vm543, %v1522, %v1497
        %v1524 = vrot.slane %v1497, 4
        %v1525 = vsel %vm543, %v1509, %v1524
        %v1527 = vunpack.c.l.s4 1934713408
        %v1528 = vunpack.c.0.s8 %v1527
        %v1529 = vperm.slane %v1523, %v1528
        %v1531 = vunpack.c.l.s4 1934713408
        %v1532 = vunpack.c.0.s8 %v1531
        %v1533 = vperm.slane %v1525, %v1532
        %v1534 = vrot.slane %v1517, 4
        %v1535 = vsel %vm543, 0.0, %v1534
        %v1536 = vrot.slane %v1521, 4
        %v1537 = vsel %vm543, 0.0, %v1536
        %v1538 = vrot.slane %v1529, 4
        %v1539 = vsel %vm543, 0.0, %v1538
        %v1540 = vrot.slane %v1533, 4
        %v1541 = vsel %vm543, 0.0, %v1540
        %v1542 = vsel %vm543, %v1536, %v1517
        %v1544 = vunpack.c.l.s4 1983009808
        %v1545 = vunpack.c.0.s8 %v1544
        %v1546 = vperm.slane %v1542, %v1545
        %v1547 = vrot.slane %v1537, 4
        %v1548 = vsel %vm543, %v1547, %v1535
        %v1550 = vunpack.c.l.s4 1983009808
        %v1551 = vunpack.c.0.s8 %v1550
        %v1552 = vperm.slane %v1548, %v1551
        %v1553 = vsel %vm543, %v1540, %v1529
        %v1555 = vunpack.c.l.s4 1983009808
        %v1556 = vunpack.c.0.s8 %v1555
        %v1557 = vperm.slane %v1553, %v1556
        %v1558 = vrot.slane %v1541, 4
        %v1559 = vsel %vm543, %v1558, %v1539
        %v1561 = vunpack.c.l.s4 1983009808
        %v1562 = vunpack.c.0.s8 %v1561
        %v1563 = vperm.slane %v1559, %v1562
        %v1564 = vrot.slane %v1552, 4
        %v1565 = vsel %vm543, %v1564, %v1546
        %v1566 = vrot.slane %v1546, 4
        %v1567 = vsel %vm543, %v1552, %v1566
        %v1569 = vunpack.c.l.s4 1934713408
        %v1570 = vunpack.c.0.s8 %v1569
        %v1571 = vperm.slane %v1565, %v1570
        %v1573 = vunpack.c.l.s4 1934713408
        %v1574 = vunpack.c.0.s8 %v1573
        %v1575 = vperm.slane %v1567, %v1574
        %v1576 = vrot.slane %v1563, 4
        %v1577 = vsel %vm543, %v1576, %v1557
        %v1578 = vrot.slane %v1557, 4
        %v1579 = vsel %vm543, %v1563, %v1578
        %v1581 = vunpack.c.l.s4 1934713408
        %v1582 = vunpack.c.0.s8 %v1581
        %v1583 = vperm.slane %v1577, %v1582
        %v1585 = vunpack.c.l.s4 1934713408
        %v1586 = vunpack.c.0.s8 %v1585
        %v1587 = vperm.slane %v1579, %v1586
        %v1588 = vrot.slane %v1583, 4
        %v1589 = vsel %vm543, %v1588, %v1571
        %v1590 = vrot.slane %v1571, 4
        %v1591 = vsel %vm543, %v1583, %v1590
        %v1592 = vrot.slane %v1587, 4
        %v1593 = vsel %vm543, %v1592, %v1575
        %v1594 = vrot.slane %v1575, 4
        %v1595 = vsel %vm543, %v1587, %v1594
        %v1596 = vpack.c.bf16 %v1589, %v1589
        %v1597 = vpack.c.bf16 %v1591, %v1591
        %v1598 = vpack.c.bf16 %v1593, %v1593
        %v1599 = vpack.c.bf16 %v1595, %v1595
        %1600 = vrot.lane.b32.xlu0 %v1285, 120
        %v1601 = vpop.permute.xlu0 %1600
        %1603 = vrot.lane.b32.xlu0 %v1285, 112
        %v1604 = vpop.permute.xlu0 %1603
        %1606 = vrot.lane.b32.xlu0 %v1285, 104
        %v1607 = vpop.permute.xlu0 %1606
        %v1609 = vrot.slane %v1604, 4
        %v1610 = vsel %vm543, %v1609, %v1285
        %v1611 = vrot.slane %v1285, 4
        %v1612 = vsel %vm543, %v1604, %v1611
        %v1614 = vunpack.c.l.s4 1983009808
        %v1615 = vunpack.c.0.s8 %v1614
        %v1616 = vperm.slane %v1610, %v1615
        %v1618 = vunpack.c.l.s4 1983009808
        %v1619 = vunpack.c.0.s8 %v1618
        %v1620 = vperm.slane %v1612, %v1619
        %v1621 = vrot.slane %v1607, 4
        %v1622 = vsel %vm543, %v1621, %v1601
        %v1623 = vrot.slane %v1601, 4
        %v1624 = vsel %vm543, %v1607, %v1623
        %v1626 = vunpack.c.l.s4 1983009808
        %v1627 = vunpack.c.0.s8 %v1626
        %v1628 = vperm.slane %v1622, %v1627
        %v1630 = vunpack.c.l.s4 1983009808
        %v1631 = vunpack.c.0.s8 %v1630
        %v1632 = vperm.slane %v1624, %v1631
        %v1633 = vrot.slane %v1628, 4
        %v1634 = vsel %vm543, %v1633, %v1616
        %v1635 = vrot.slane %v1616, 4
        %v1636 = vsel %vm543, %v1628, %v1635
        %v1638 = vunpack.c.l.s4 1934713408
        %v1639 = vunpack.c.0.s8 %v1638
        %v1640 = vperm.slane %v1634, %v1639
        %v1642 = vunpack.c.l.s4 1934713408
        %v1643 = vunpack.c.0.s8 %v1642
        %v1644 = vperm.slane %v1636, %v1643
        %v1645 = vrot.slane %v1632, 4
        %v1646 = vsel %vm543, %v1645, %v1620
        %v1647 = vrot.slane %v1620, 4
        %v1648 = vsel %vm543, %v1632, %v1647
        %v1650 = vunpack.c.l.s4 1934713408
        %v1651 = vunpack.c.0.s8 %v1650
        %v1652 = vperm.slane %v1646, %v1651
        %v1654 = vunpack.c.l.s4 1934713408
        %v1655 = vunpack.c.0.s8 %v1654
        %v1656 = vperm.slane %v1648, %v1655
        %v1657 = vrot.slane %v1640, 4
        %v1658 = vsel %vm543, 0.0, %v1657
        %v1659 = vrot.slane %v1644, 4
        %v1660 = vsel %vm543, 0.0, %v1659
        %v1661 = vrot.slane %v1652, 4
        %v1662 = vsel %vm543, 0.0, %v1661
        %v1663 = vrot.slane %v1656, 4
        %v1664 = vsel %vm543, 0.0, %v1663
        %v1665 = vsel %vm543, %v1659, %v1640
        %v1667 = vunpack.c.l.s4 1983009808
        %v1668 = vunpack.c.0.s8 %v1667
        %v1669 = vperm.slane %v1665, %v1668
        %v1670 = vrot.slane %v1660, 4
        %v1671 = vsel %vm543, %v1670, %v1658
        %v1673 = vunpack.c.l.s4 1983009808
        %v1674 = vunpack.c.0.s8 %v1673
        %v1675 = vperm.slane %v1671, %v1674
        %v1676 = vsel %vm543, %v1663, %v1652
        %v1678 = vunpack.c.l.s4 1983009808
        %v1679 = vunpack.c.0.s8 %v1678
        %v1680 = vperm.slane %v1676, %v1679
        %v1681 = vrot.slane %v1664, 4
        %v1682 = vsel %vm543, %v1681, %v1662
        %v1684 = vunpack.c.l.s4 1983009808
        %v1685 = vunpack.c.0.s8 %v1684
        %v1686 = vperm.slane %v1682, %v1685
        %v1687 = vrot.slane %v1675, 4
        %v1688 = vsel %vm543, %v1687, %v1669
        %v1689 = vrot.slane %v1669, 4
        %v1690 = vsel %vm543, %v1675, %v1689
        %v1692 = vunpack.c.l.s4 1934713408
        %v1693 = vunpack.c.0.s8 %v1692
        %v1694 = vperm.slane %v1688, %v1693
        %v1696 = vunpack.c.l.s4 1934713408
        %v1697 = vunpack.c.0.s8 %v1696
        %v1698 = vperm.slane %v1690, %v1697
        %v1699 = vrot.slane %v1686, 4
        %v1700 = vsel %vm543, %v1699, %v1680
        %v1701 = vrot.slane %v1680, 4
        %v1702 = vsel %vm543, %v1686, %v1701
        %v1704 = vunpack.c.l.s4 1934713408
        %v1705 = vunpack.c.0.s8 %v1704
        %v1706 = vperm.slane %v1700, %v1705
        %v1708 = vunpack.c.l.s4 1934713408
        %v1709 = vunpack.c.0.s8 %v1708
        %v1710 = vperm.slane %v1702, %v1709
        %v1711 = vrot.slane %v1706, 4
        %v1712 = vsel %vm543, %v1711, %v1694
        %v1713 = vrot.slane %v1694, 4
        %v1714 = vsel %vm543, %v1706, %v1713
        %v1715 = vrot.slane %v1710, 4
        %v1716 = vsel %vm543, %v1715, %v1698
        %v1717 = vrot.slane %v1698, 4
        %v1718 = vsel %vm543, %v1710, %v1717
        %v1719 = vpack.c.bf16 %v1712, %v1712
        %v1720 = vpack.c.bf16 %v1714, %v1714
        %v1721 = vpack.c.bf16 %v1716, %v1716
        %v1722 = vpack.c.bf16 %v1718, %v1718
        %v1724 = vsel %vm904, %v1596, 0
        %v1727 = vsel %vm904, %v1472, 0
        %1729 = vmatpush.bf16.xpose.msra.mxu0 0
        %1730 = vmatpush.bf16.xpose.msra.mxu0 0
        %1731 = vmatpush.bf16.xpose.msra.mxu0 0
        %1732 = vmatpush.bf16.xpose.msra.mxu0 0
        %1733 = vmatpush.bf16.xpose.msra.mxu0 0
        %1734 = vmatpush.bf16.xpose.msra.mxu0 0
        %1735 = vmatpush.bf16.xpose.msra.mxu0 0
        %1736 = vmatpush.bf16.xpose.msra.mxu0 %v1727
        %1737 = vmatmul.bf16.gmra.mxu0 %v1724
        %v1738 = vpop.f32.mrf.mxu0
        %v1739 = vadd.f32 0.0, %v1738
        %v1740 = vpop.f32.mrf.mxu0
        %1741 = vdwg.mxu0
        %v1743 = vsel %vm904, %v1597, 0
        %v1746 = vsel %vm904, %v1473, 0
        %1748 = vmatpush.bf16.xpose.msra.mxu0 0
        %1749 = vmatpush.bf16.xpose.msra.mxu0 0
        %1750 = vmatpush.bf16.xpose.msra.mxu0 0
        %1751 = vmatpush.bf16.xpose.msra.mxu0 0
        %1752 = vmatpush.bf16.xpose.msra.mxu0 0
        %1753 = vmatpush.bf16.xpose.msra.mxu0 0
        %1754 = vmatpush.bf16.xpose.msra.mxu0 0
        %1755 = vmatpush.bf16.xpose.msra.mxu0 %v1746
        %1756 = vmatmul.bf16.gmra.mxu0 %v1743
        %v1757 = vpop.f32.mrf.mxu0
        %v1758 = vadd.f32 0.0, %v1757
        %v1759 = vpop.f32.mrf.mxu0
        %1760 = vdwg.mxu0
        %v1762 = vsel %vm904, %v1598, 0
        %v1765 = vsel %vm904, %v1474, 0
        %1767 = vmatpush.bf16.xpose.msra.mxu0 0
        %1768 = vmatpush.bf16.xpose.msra.mxu0 0
        %1769 = vmatpush.bf16.xpose.msra.mxu0 0
        %1770 = vmatpush.bf16.xpose.msra.mxu0 0
        %1771 = vmatpush.bf16.xpose.msra.mxu0 0
        %1772 = vmatpush.bf16.xpose.msra.mxu0 0
        %1773 = vmatpush.bf16.xpose.msra.mxu0 0
        %1774 = vmatpush.bf16.xpose.msra.mxu0 %v1765
        %1775 = vmatmul.bf16.gmra.mxu0 %v1762
        %v1776 = vpop.f32.mrf.mxu0
        %v1777 = vadd.f32 0.0, %v1776
        %v1778 = vpop.f32.mrf.mxu0
        %1779 = vdwg.mxu0
        %v1781 = vsel %vm904, %v1599, 0
        %v1784 = vsel %vm904, %v1475, 0
        %1786 = vmatpush.bf16.xpose.msra.mxu0 0
        %1787 = vmatpush.bf16.xpose.msra.mxu0 0
        %1788 = vmatpush.bf16.xpose.msra.mxu0 0
        %1789 = vmatpush.bf16.xpose.msra.mxu0 0
        %1790 = vmatpush.bf16.xpose.msra.mxu0 0
        %1791 = vmatpush.bf16.xpose.msra.mxu0 0
        %1792 = vmatpush.bf16.xpose.msra.mxu0 0
        %1793 = vmatpush.bf16.xpose.msra.mxu0 %v1784
        %1794 = vmatmul.bf16.gmra.mxu0 %v1781
        %v1795 = vpop.f32.mrf.mxu0
        %v1796 = vadd.f32 0.0, %v1795
        %v1797 = vpop.f32.mrf.mxu0
        %1798 = vdwg.mxu0
        %v1799 = vsel %vm982, %v1739, -10000000.0
        %v1800 = vsel %vm982, %v1758, -10000000.0
        %v1801 = vsel %vm982, %v1777, -10000000.0
        %v1802 = vsel %vm982, %v1796, -10000000.0
        %v1803 = vsel %vm904, %v1799, -inf
        %1804 = vmax.xlane.f32.xlu0 %v1803
        %v1805 = vpop.xlane.xlu0 %1804
        %v1806 = vsel %vm904, %v1800, -inf
        %1807 = vmax.xlane.f32.xlu0 %v1806
        %v1808 = vpop.xlane.xlu0 %1807
        %v1809 = vsel %vm904, %v1801, -inf
        %1810 = vmax.xlane.f32.xlu0 %v1809
        %v1811 = vpop.xlane.xlu0 %1810
        %v1812 = vsel %vm904, %v1802, -inf
        %1813 = vmax.xlane.f32.xlu0 %v1812
        %v1814 = vpop.xlane.xlu0 %1813
        %v1815 = vsub.f32 %v1799, %v1805
        %v1816 = vsub.f32 %v1800, %v1808
        %v1817 = vsub.f32 %v1801, %v1811
        %v1818 = vsub.f32 %v1802, %v1814
        %v1819 = vmul.f32 %v1815, 1.442695
        %v1820 = vpow.pop %v1819
        %v1821 = vmul.f32 %v1816, 1.442695
        %v1822 = vpow.pop %v1821
        %v1823 = vmul.f32 %v1817, 1.442695
        %v1824 = vpow.pop %v1823
        %v1825 = vmul.f32 %v1818, 1.442695
        %v1826 = vpow.pop %v1825
        %v1827 = vsel %vm904, %v1820, 0.0
        %1828 = vadd.xlane.f32.xlu0 %v1827
        %v1829 = vpop.xlane.xlu0 %1828
        %v1830 = vsel %vm904, %v1822, 0.0
        %1831 = vadd.xlane.f32.xlu0 %v1830
        %v1832 = vpop.xlane.xlu0 %1831
        %v1833 = vsel %vm904, %v1824, 0.0
        %1834 = vadd.xlane.f32.xlu0 %v1833
        %v1835 = vpop.xlane.xlu0 %1834
        %v1836 = vsel %vm904, %v1826, 0.0
        %1837 = vadd.xlane.f32.xlu0 %v1836
        %v1838 = vpop.xlane.xlu0 %1837
        %v1839 = vrcp.pop %v1829
        %v1840 = vrcp.pop %v1832
        %v1841 = vrcp.pop %v1835
        %v1842 = vrcp.pop %v1838
        %v1843 = vmul.f32 %v1820, %v1839
        %v1844 = vmul.f32 %v1822, %v1840
        %v1845 = vmul.f32 %v1824, %v1841
        %v1846 = vmul.f32 %v1826, %v1842
        %v1847 = vpack.c.bf16 %v1843, %v1843
        %v1848 = vpack.c.bf16 %v1844, %v1844
        %v1849 = vpack.c.bf16 %v1845, %v1845
        %v1850 = vpack.c.bf16 %v1846, %v1846
        %v1852 = vsel %vm904, %v1847, 0
        %v1855 = vsel %vm1038, %v1719, 0
        %1857 = vmatpush.bf16.msra.mxu0 0
        %1858 = vmatpush.bf16.msra.mxu0 0
        %1859 = vmatpush.bf16.msra.mxu0 0
        %1860 = vmatpush.bf16.msra.mxu0 0
        %1861 = vmatpush.bf16.msra.mxu0 0
        %1862 = vmatpush.bf16.msra.mxu0 0
        %1863 = vmatpush.bf16.msra.mxu0 0
        %1864 = vmatpush.bf16.msra.mxu0 %v1855
        %1865 = vmatmul.bf16.gmra.mxu0 %v1852
        %v1866 = vpop.f32.mrf.mxu0
        %v1867 = vadd.f32 0.0, %v1866
        %v1868 = vpop.f32.mrf.mxu0
        %1869 = vdwg.mxu0
        %v1871 = vsel %vm904, %v1848, 0
        %v1874 = vsel %vm1038, %v1720, 0
        %1876 = vmatpush.bf16.msra.mxu0 0
        %1877 = vmatpush.bf16.msra.mxu0 0
        %1878 = vmatpush.bf16.msra.mxu0 0
        %1879 = vmatpush.bf16.msra.mxu0 0
        %1880 = vmatpush.bf16.msra.mxu0 0
        %1881 = vmatpush.bf16.msra.mxu0 0
        %1882 = vmatpush.bf16.msra.mxu0 0
        %1883 = vmatpush.bf16.msra.mxu0 %v1874
        %1884 = vmatmul.bf16.gmra.mxu0 %v1871
        %v1885 = vpop.f32.mrf.mxu0
        %v1886 = vadd.f32 0.0, %v1885
        %v1887 = vpop.f32.mrf.mxu0
        %1888 = vdwg.mxu0
        %v1890 = vsel %vm904, %v1849, 0
        %v1893 = vsel %vm1038, %v1721, 0
        %1895 = vmatpush.bf16.msra.mxu0 0
        %1896 = vmatpush.bf16.msra.mxu0 0
        %1897 = vmatpush.bf16.msra.mxu0 0
        %1898 = vmatpush.bf16.msra.mxu0 0
        %1899 = vmatpush.bf16.msra.mxu0 0
        %1900 = vmatpush.bf16.msra.mxu0 0
        %1901 = vmatpush.bf16.msra.mxu0 0
        %1902 = vmatpush.bf16.msra.mxu0 %v1893
        %1903 = vmatmul.bf16.gmra.mxu0 %v1890
        %v1904 = vpop.f32.mrf.mxu0
        %v1905 = vadd.f32 0.0, %v1904
        %v1906 = vpop.f32.mrf.mxu0
        %1907 = vdwg.mxu0
        %v1909 = vsel %vm904, %v1850, 0
        %v1912 = vsel %vm1038, %v1722, 0
        %1914 = vmatpush.bf16.msra.mxu0 0
        %1915 = vmatpush.bf16.msra.mxu0 0
        %1916 = vmatpush.bf16.msra.mxu0 0
        %1917 = vmatpush.bf16.msra.mxu0 0
        %1918 = vmatpush.bf16.msra.mxu0 0
        %1919 = vmatpush.bf16.msra.mxu0 0
        %1920 = vmatpush.bf16.msra.mxu0 0
        %1921 = vmatpush.bf16.msra.mxu0 %v1912
        %1922 = vmatmul.bf16.gmra.mxu0 %v1909
        %v1923 = vpop.f32.mrf.mxu0
        %v1924 = vadd.f32 0.0, %v1923
        %v1925 = vpop.f32.mrf.mxu0
        %1926 = vdwg.mxu0
        %v1927 = vrot.slane %v1905, 4
        %v1928 = vsel %vm543, %v1927, %v1867
        %v1929 = vrot.slane %v1867, 4
        %v1930 = vsel %vm543, %v1905, %v1929
        %v1932 = vunpack.c.l.s4 1983009808
        %v1933 = vunpack.c.0.s8 %v1932
        %v1934 = vperm.slane %v1928, %v1933
        %v1936 = vunpack.c.l.s4 1983009808
        %v1937 = vunpack.c.0.s8 %v1936
        %v1938 = vperm.slane %v1930, %v1937
        %v1939 = vrot.slane %v1924, 4
        %v1940 = vsel %vm543, %v1939, %v1886
        %v1941 = vrot.slane %v1886, 4
        %v1942 = vsel %vm543, %v1924, %v1941
        %v1944 = vunpack.c.l.s4 1983009808
        %v1945 = vunpack.c.0.s8 %v1944
        %v1946 = vperm.slane %v1940, %v1945
        %v1948 = vunpack.c.l.s4 1983009808
        %v1949 = vunpack.c.0.s8 %v1948
        %v1950 = vperm.slane %v1942, %v1949
        %v1951 = vrot.slane %v1946, 4
        %v1952 = vsel %vm543, %v1951, %v1934
        %v1953 = vrot.slane %v1934, 4
        %v1954 = vsel %vm543, %v1946, %v1953
        %v1956 = vunpack.c.l.s4 1934713408
        %v1957 = vunpack.c.0.s8 %v1956
        %v1958 = vperm.slane %v1952, %v1957
        %v1960 = vunpack.c.l.s4 1934713408
        %v1961 = vunpack.c.0.s8 %v1960
        %v1962 = vperm.slane %v1954, %v1961
        %v1963 = vrot.slane %v1950, 4
        %v1964 = vsel %vm543, %v1963, %v1938
        %v1965 = vrot.slane %v1938, 4
        %v1966 = vsel %vm543, %v1950, %v1965
        %v1968 = vunpack.c.l.s4 1934713408
        %v1969 = vunpack.c.0.s8 %v1968
        %v1970 = vperm.slane %v1964, %v1969
        %v1972 = vunpack.c.l.s4 1934713408
        %v1973 = vunpack.c.0.s8 %v1972
        %v1974 = vperm.slane %v1966, %v1973
        %v1975 = vrot.slane %v1958, 4
        %v1976 = vsel %vm543, 0.0, %v1975
        %v1977 = vrot.slane %v1962, 4
        %v1978 = vsel %vm543, 0.0, %v1977
        %v1979 = vrot.slane %v1970, 4
        %v1980 = vsel %vm543, 0.0, %v1979
        %v1981 = vrot.slane %v1974, 4
        %v1982 = vsel %vm543, 0.0, %v1981
        %v1983 = vsel %vm543, %v1977, %v1958
        %v1985 = vunpack.c.l.s4 1983009808
        %v1986 = vunpack.c.0.s8 %v1985
        %v1987 = vperm.slane %v1983, %v1986
        %v1988 = vrot.slane %v1978, 4
        %v1989 = vsel %vm543, %v1988, %v1976
        %v1991 = vunpack.c.l.s4 1983009808
        %v1992 = vunpack.c.0.s8 %v1991
        %v1993 = vperm.slane %v1989, %v1992
        %v1994 = vsel %vm543, %v1981, %v1970
        %v1996 = vunpack.c.l.s4 1983009808
        %v1997 = vunpack.c.0.s8 %v1996
        %v1998 = vperm.slane %v1994, %v1997
        %v1999 = vrot.slane %v1982, 4
        %v2000 = vsel %vm543, %v1999, %v1980
        %v2002 = vunpack.c.l.s4 1983009808
        %v2003 = vunpack.c.0.s8 %v2002
        %v2004 = vperm.slane %v2000, %v2003
        %v2005 = vrot.slane %v1993, 4
        %v2006 = vsel %vm543, %v2005, %v1987
        %v2007 = vrot.slane %v1987, 4
        %v2008 = vsel %vm543, %v1993, %v2007
        %v2010 = vunpack.c.l.s4 1934713408
        %v2011 = vunpack.c.0.s8 %v2010
        %v2012 = vperm.slane %v2006, %v2011
        %v2014 = vunpack.c.l.s4 1934713408
        %v2015 = vunpack.c.0.s8 %v2014
        %v2016 = vperm.slane %v2008, %v2015
        %v2017 = vrot.slane %v2004, 4
        %v2018 = vsel %vm543, %v2017, %v1998
        %v2019 = vrot.slane %v1998, 4
        %v2020 = vsel %vm543, %v2004, %v2019
        %v2022 = vunpack.c.l.s4 1934713408
        %v2023 = vunpack.c.0.s8 %v2022
        %v2024 = vperm.slane %v2018, %v2023
        %v2026 = vunpack.c.l.s4 1934713408
        %v2027 = vunpack.c.0.s8 %v2026
        %v2028 = vperm.slane %v2020, %v2027
        %v2029 = vrot.slane %v2024, 4
        %v2030 = vsel %vm543, %v2029, %v2012
        %v2031 = vrot.slane %v2012, 4
        %v2032 = vsel %vm543, %v2024, %v2031
        %v2033 = vrot.slane %v2028, 4
        %v2034 = vsel %vm543, %v2033, %v2016
        %v2035 = vrot.slane %v2016, 4
        %v2036 = vsel %vm543, %v2028, %v2035
        %2038 = vrot.lane.b32.xlu0 %v2032, 8
        %v2039 = vpop.permute.xlu0 %2038
        %2042 = vrot.lane.b32.xlu0 %v2034, 16
        %v2043 = vpop.permute.xlu0 %2042
        %2046 = vrot.lane.b32.xlu0 %v2036, 24
        %v2047 = vpop.permute.xlu0 %2046
        %v2049 = vsel %vm904, %v2030, %v2039
        %v2050 = vsel %vm431, %v2049, %v2043
        %v2051 = vsel %vm1236, %v2050, %v2047
        %v2052 = vsel %vm477, %v2051, 0.0
        %2053 = vadd.xlane.f32.xlu0 %v2052
        %v2054 = vpop.xlane.xlu0 %2053
        %v2055 = vmul.f32 %v2054, %v1247
        %v2056 = vsub.f32 %v2051, %v2055
        %v2057 = vmul.f32 %v2056, %v2056
        %v2058 = vsel %vm477, %v2057, 0.0
        %2059 = vadd.xlane.f32.xlu0 %v2058
        %v2060 = vpop.xlane.xlu0 %2059
        %v2061 = vmul.f32 %v2060, %v1260
        %v2062 = vrsqrt.pop %v2061
        %v2063 = vmul.f32 %v2062, %v2061
        %v2064 = vmul.f32 %v2063, %v2062
        %v2065 = vmul.f32 0.5, %v2064
        %v2066 = vsub.f32 1.5, %v2065
        %v2067 = vmul.f32 %v2062, %v2066
        %v2068 = vmul.f32 %v2061, %v2067
        %vm2069 = vcmp.eq.f32.partialorder %v2061, inf
        %v2070 = vsel %vm2069, %v2061, %v2068
        %vm2071 = vcmp.eq.f32.partialorder %v2061, 0.0
        %v2072 = vand.u32 %v2061, 2147483648
        %v2073 = vsel %vm2071, %v2072, %v2070
        %v2074 = vadd.f32 %v2073, 1e-06
        %v2075 = vrcp.pop %v2074
        %v2076 = vmul.f32 %v1277, %v2056
        %v2077 = vmul.f32 %v2076, %v2075
        %v2078 = vadd.f32 %v1285, %v2077
        %v2079 = vadd.f32 %v2078, %v1283
        %vm2080 = vcmp.gt.f32.partialorder %v455, 0.0
        %v2081 = vsel %vm2080, 1, 0
        %2082 = vset.pattern.permute.xlu0 0
        %2083 = vperm.xlu0 %2082, %v2081
        %v2084 = vpop.permute.xlu0 %2083
        %vm2085 = vcmp.eq.s32.totalorder %v2084, 1
        %v2086 = vsel %vm2085, %v2079, -inf
        %v2087 = vsel %vm477, %v2086, -inf
        %v2088 = vrot.slane %v2087, 4
        %v2089 = vmax.f32 %v2087, %v2088
        %v2090 = vrot.slane %v2089, 2
        %v2091 = vmax.f32 %v2089, %v2090
        %v2092 = vrot.slane %v2091, 1
        %v2093 = vmax.f32 %v2091, %v2092
        %vm2094 = vcmask 253952
        %2095 = vst.msk [vmem:[%s407] sm:$0x1] %vm2094, %v2093
        %s2096 = sand.u32 %s259, 1
        %s2097 = scalar_lea.sflag [#allocation4], %s2096
        %s2098 = sand.u32 %s259, 1
        %s2099 = scalar_lea.vmem [#allocation7], %s2098
        // Predicated region
        $region69: #{tpu_custom_call.1} parent=59 // pred_check
          %p2100 = pneg %p269
        $region70: #{tpu_custom_call.1} parent=59 // pred_check_branch
          %2102 = sbr.rel (%p2100) target = $region72
        $region71: #{tpu_custom_call.1} parent=59 // pred_region
          %2104 = vsyncadd %s2097, 0
          %s2105 = scalar_lea.hbm %s10, %s26
          %s2107 = sshll.u32 %s2099, 4
          %s2108 = int_to_ptr.vmem [resolvable:$true] %s2107
          %s2109 = sshll.u32 %s2105, 4
          %s2110 = int_to_ptr.hbm [resolvable:$true] %s2109
          %2112 = dma.vmem_to_hbm [thread:$0]  %s2108, 16, %s2110, %s2097
        $region72: #{tpu_custom_call.1} parent=59 // pred_fallthru
          _
      $region60: #{tpu_custom_call.1} parent=5 // pred_fallthru
        _
      %p2113 = scmp.le.s32.totalorder 2, %s21
      // Predicated region
      $region73: #{tpu_custom_call.1} parent=5 // pred_check
        %p2114 = pneg %p2113
      $region74: #{tpu_custom_call.1} parent=5 // pred_check_branch
        %2116 = sbr.rel (%p2114) target = $region76
      $region75: #{tpu_custom_call.1} parent=5 // pred_region
        %s2117 = ssub.s32 %s21, 2
        // Predicated region
        $region77: #{tpu_custom_call.1} parent=75 // pred_check
          %p2118 = pneg %p275
        $region78: #{tpu_custom_call.1} parent=75 // pred_check_branch
          %2120 = sbr.rel (%p2118) target = $region80
        $region79: #{tpu_custom_call.1} parent=75 // pred_region
          %s2121 = sand.u32 %s260, 1
          %s2122 = scalar_lea.sflag [#allocation4], %s2121
          %s2123 = sand.u32 %s260, 1
          %s2124 = scalar_lea.vmem [#allocation7], %s2123
          %2126 = dma.done %s2122, 16
        $region80: #{tpu_custom_call.1} parent=75 // pred_fallthru
          _
      $region76: #{tpu_custom_call.1} parent=5 // pred_fallthru
        _
    $region6: #{tpu_custom_call.1} parent=1 // loop_footer
      %s25 = sadd.s32 1, %s21
    $region7: #{tpu_custom_call.1} parent=1 // loop_footer_branch
      %20 = sbr.rel target = $region3
    $region8: #{tpu_custom_call.1} parent=1 // loop_exit
      _
    %2127 = vsyncpa [#allocation3], 1
    %s2128 = scalar_lea.sflag [#allocation3], 1
    %2129 = vsyncpa %s2128, 1
    %2130 = vsyncpa [#allocation6], 1
    %2131 = vsyncpa [#allocation4], 1
    %s2132 = scalar_lea.sflag [#allocation4], 1
    %2133 = vsyncpa %s2132, 1

</llo_original>
